<compile_context>
chip_gen: v6e
topology: v6e:2x2x1
jax: 0.10.0
libtpu: 0.0.40
codegen_flags: <defaults>
</compile_context>

<pallas_src>
import jax
import jax.numpy as jnp
from jax.experimental import pallas as pl
from jax.experimental.pallas import tpu as pltpu


def _round_up(n, m):
    return -(-n // m) * m


def _lstm_rec_kernel(pg_ref, h0_ref, c0_ref, wh_ref, hseq_ref, cfin_ref,
                     h_sc, c_sc):
    """Recurrent part only: gates = pre_gates + h @ W_h, then cell update.

    pg_ref : (Tc, b_tile, 4Hp)  pre-computed x@W_x + b for this time chunk
    wh_ref : (Hp, 4Hp)          recurrent weights, gate order [f, i, o | u]
    h_sc/c_sc : (b_tile, Hp) f32 VMEM-resident recurrent state
    """
    c_idx = pl.program_id(1)
    Tc = pg_ref.shape[0]
    Hp = h_sc.shape[1]

    # Load initial state into the VMEM-resident recurrent scratch.
    @pl.when(c_idx == 0)
    def _():
        h_sc[...] = h0_ref[...].astype(jnp.float32)
        c_sc[...] = c0_ref[...].astype(jnp.float32)

    wh = wh_ref[...]          # hoisted: loaded once per chunk
    h = h_sc[...]             # carried in registers across the unrolled chunk
    c = c_sc[...]

    # Fully unrolled time chunk (Tc is a small static constant) -> static
    # indices everywhere; the LLO scheduler sees the whole chunk.
    for j in range(Tc):
        gates = pg_ref[j].astype(jnp.float32) + jnp.dot(
            h.astype(wh.dtype), wh, preferred_element_type=jnp.float32)
        # Gate packing is [f, i, o | u]: one wide tanh-based sigmoid over the
        # contiguous 3*Hp slab (single EUP pass), one tanh over the u slab.
        sig = 0.5 * jnp.tanh(0.5 * gates[:, :3 * Hp]) + 0.5
        u = jnp.tanh(gates[:, 3 * Hp:])
        f = sig[:, 0 * Hp:1 * Hp]
        i = sig[:, 1 * Hp:2 * Hp]
        o = sig[:, 2 * Hp:3 * Hp]
        c = c * f + i * u
        h = jnp.tanh(c) * o
        hseq_ref[j] = h.astype(hseq_ref.dtype)   # lane-dense (Hp % 128 == 0)

    h_sc[...] = h
    c_sc[...] = c

    @pl.when(c_idx == pl.num_programs(1) - 1)
    def _():
        cfin_ref[...] = c.astype(cfin_ref.dtype)


def pack_lstm_params(w_f, w_i, w_u, w_o, b_f, b_i, b_u, b_o,
                     embedding_size, hidden_size, hidden_pad):
    """Pack nn.Linear-style per-gate params into MXU-friendly matrices.

    Each w_* is (H, E+H) (y = xh @ w.T + b, like nn.Linear(E+H, H)).
    Gate column order is [f, i, o, u]; per-gate output width is zero-padded
    H -> hidden_pad so all gate slabs are 128-lane aligned.  The zero padding
    is exact: padded gate columns produce c_pad = 0, h_pad = 0 at every step.
    """
    E, H, Hp = embedding_size, hidden_size, hidden_pad

    def pad_cols(w):                    # (E+H, H) -> (E+H, Hp)
        return jnp.pad(w.T, ((0, 0), (0, Hp - H)))

    packed = jnp.concatenate(
        [pad_cols(w_f), pad_cols(w_i), pad_cols(w_o), pad_cols(w_u)], axis=1)
    w_x = packed[:E]                                       # (E, 4Hp)
    w_h = jnp.pad(packed[E:], ((0, Hp - H), (0, 0)))       # (Hp, 4Hp)

    def pad_b(b):
        return jnp.pad(b, (0, Hp - H))

    b_all = jnp.concatenate([pad_b(b_f), pad_b(b_i), pad_b(b_o), pad_b(b_u)])
    return w_x, w_h, b_all


def lstm_seq_pallas(x_seq, h0, c0, w_x, w_h, b_all, *, mxu_dtype=None,
                    out_dtype=None, time_chunk=4, megacore_batch_split=True):
    """Run the LSTM cell over a sequence with one recurrent Pallas kernel.

    x_seq : (T, B, E)   h0, c0 : (B, H)
    w_x : (E, 4*Hp)  w_h : (Hp, 4*Hp)  b_all : (4*Hp,)  (from pack_lstm_params)
    Returns (h_seq (T,B,H), h_T (B,H), c_T (B,H)).
    """
    T, B, E = x_seq.shape
    H = h0.shape[1]
    Hp, G = w_h.shape                       # G = 4*Hp
    f32 = jnp.float32
    out_dtype = x_seq.dtype if out_dtype is None else out_dtype
    mxu_dtype = jnp.dtype(x_seq.dtype if mxu_dtype is None else mxu_dtype)
    is_bf16 = mxu_dtype == jnp.dtype(jnp.bfloat16)

    # ---- batch tiling (bf16 packs 16 sublanes; split for v7x's 2 TCs) ----
    sub = 16 if is_bf16 else 8
    B_al = _round_up(B, sub)
    if B_al > 128:
        b_tile = 128
    elif megacore_batch_split and B_al >= 2 * sub:
        b_tile = _round_up(-(-B_al // 2), sub)   # ~half batch per TensorCore
    else:
        b_tile = B_al
    B_pad = _round_up(B_al, b_tile)
    n_bt = B_pad // b_tile

    # ---- time chunking: largest divisor of T that is <= time_chunk ----
    Tc = 1
    for d in range(min(T, max(1, time_chunk)), 0, -1):
        if T % d == 0:
            Tc = d
            break
    n_ch = T // Tc

    # ---- hoisted input projection (one big parallel GEMM, bias folded) ----
    pg_dtype = f32 if mxu_dtype == jnp.dtype(f32) else mxu_dtype
    xp = jnp.pad(x_seq, ((0, 0), (0, B_pad - B), (0, 0)))
    pre = jnp.einsum("tbe,eg->tbg", xp.astype(mxu_dtype), w_x.astype(mxu_dtype),
                     preferred_element_type=f32) + b_all.astype(f32)
    pre = pre.astype(pg_dtype)                              # (T, B_pad, 4Hp)

    hp = jnp.pad(h0, ((0, B_pad - B), (0, Hp - H))).astype(f32)
    cp = jnp.pad(c0, ((0, B_pad - B), (0, Hp - H))).astype(f32)
    whp = w_h.astype(mxu_dtype)

    # ---- explicit VMEM budget (v5e default 16 MiB, v7x 32 MiB scoped) ----
    isz = lambda dt: jnp.dtype(dt).itemsize
    vmem_est = (
        2 * Tc * b_tile * G * isz(pg_dtype)        # pre-gate blocks (2 bufs)
        + Hp * G * isz(mxu_dtype)                  # W_h (Buffered(1))
        + 2 * b_tile * Hp * 4                      # h0, c0 (Buffered(1))
        + 2 * Tc * b_tile * Hp * isz(out_dtype)    # h_seq out blocks
        + 2 * b_tile * Hp * isz(out_dtype)         # c_fin out block
        + 2 * b_tile * Hp * 4                      # h/c f32 scratch
    )
    vmem_limit = min(127 * 1024 * 1024,
                     max(32 * 1024 * 1024, int(1.5 * vmem_est) + (1 << 20)))

    const_buf = pl.Buffered(1)   # no double buffering for constant-index blocks

    h_seq, c_fin = pl.pallas_call(
        _lstm_rec_kernel,
        out_shape=(
            jax.ShapeDtypeStruct((T, B_pad, Hp), out_dtype),
            jax.ShapeDtypeStruct((B_pad, Hp), out_dtype),
        ),
        grid_spec=pltpu.PrefetchScalarGridSpec(
            num_scalar_prefetch=0,
            grid=(n_bt, n_ch),
            in_specs=[
                pl.BlockSpec((Tc, b_tile, G), lambda i, c: (c, i, 0)),
                pl.BlockSpec((b_tile, Hp), lambda i, c: (i, 0),
                             pipeline_mode=const_buf),
                pl.BlockSpec((b_tile, Hp), lambda i, c: (i, 0),
                             pipeline_mode=const_buf),
                pl.BlockSpec((Hp, G), lambda i, c: (0, 0),
                             pipeline_mode=const_buf),
            ],
            out_specs=[
                pl.BlockSpec((Tc, b_tile, Hp), lambda i, c: (c, i, 0)),
                pl.BlockSpec((b_tile, Hp), lambda i, c: (i, 0)),
            ],
            scratch_shapes=[
                pltpu.VMEM((b_tile, Hp), jnp.float32),   # h state
                pltpu.VMEM((b_tile, Hp), jnp.float32),   # c state
            ],
        ),
        compiler_params=pltpu.CompilerParams(
            dimension_semantics=("parallel", "arbitrary"),
            vmem_limit_bytes=vmem_limit),
    )(pre, hp, cp, whp)

    h_seq = h_seq[:, :B, :H]
    c_T = c_fin[:B, :H]
    return h_seq, h_seq[-1], c_T


def lstm_module_forward(inp, state, w_x, w_h, b_all, *, mxu_dtype=None):
    """Single-step forward matching LSTM.forward: returns (h, (h, c))."""
    h, c = state
    _, h_new, c_new = lstm_seq_pallas(inp[None], h, c, w_x, w_h, b_all,
                                      mxu_dtype=mxu_dtype)
    return h_new, (h_new, c_new)


def lstm_ref_step(x, h, c, params):
    """Pure-JAX single step, exactly the PyTorch module semantics."""
    w_f, w_i, w_u, w_o, b_f, b_i, b_u, b_o = params
    xh = jnp.concatenate([x, h], axis=1)
    f = jax.nn.sigmoid(xh @ w_f.T + b_f)
    i = jax.nn.sigmoid(xh @ w_i.T + b_i)
    u = jnp.tanh(xh @ w_u.T + b_u)
    o = jax.nn.sigmoid(xh @ w_o.T + b_o)
    c_new = c * f + i * u
    h_new = jnp.tanh(c_new) * o
    return h_new, c_new


if __name__ == "__main__":
    B, E, H, T = 8, 32, 32, 8            # batch, embedding, hidden, seq len
    Hp = _round_up(H, 128)               # lane-dense padded hidden size

    key = jax.random.PRNGKey(0)
    (kx, kh, kc, kwf, kwi, kwu, kwo,
     kbf, kbi, kbu, kbo) = jax.random.split(key, 11)

    x_seq = jax.random.normal(kx, (T, B, E), dtype=jnp.float32)
    h0 = jax.random.normal(kh, (B, H), dtype=jnp.float32)
    c0 = jax.random.normal(kc, (B, H), dtype=jnp.float32)

    bound = 1.0 / jnp.sqrt(E + H)

    def uni(k, shape):
        return jax.random.uniform(k, shape, jnp.float32, -bound, bound)

    w_f, w_i = uni(kwf, (H, E + H)), uni(kwi, (H, E + H))
    w_u, w_o = uni(kwu, (H, E + H)), uni(kwo, (H, E + H))
    b_f, b_i, b_u, b_o = uni(kbf, (H,)), uni(kbi, (H,)), uni(kbu, (H,)), uni(kbo, (H,))

    w_x, w_h, b_all = pack_lstm_params(
        w_f, w_i, w_u, w_o, b_f, b_i, b_u, b_o, E, H, Hp)

    # --- Pallas: whole sequence, chunked time loop (f32 MXU path) ---
    h_seq, h_T, c_T = lstm_seq_pallas(x_seq, h0, c0, w_x, w_h, b_all,
                                      time_chunk=4)
    jax.block_until_ready((h_seq, h_T, c_T))

    # --- reference: step-by-step, exactly the torch module semantics ---
    params = (w_f, w_i, w_u, w_o, b_f, b_i, b_u, b_o)
    h_r, c_r = h0, c0
    h_seq_ref = []
    for t in range(T):
        h_r, c_r = lstm_ref_step(x_seq[t], h_r, c_r, params)
        h_seq_ref.append(h_r)
    h_seq_ref = jnp.stack(h_seq_ref)

    assert jnp.allclose(h_seq, h_seq_ref, atol=1e-5, rtol=1e-5)
    assert jnp.allclose(h_T, h_r, atol=1e-5, rtol=1e-5)
    assert jnp.allclose(c_T, c_r, atol=1e-5, rtol=1e-5)

    # --- single-step call matching LSTM.forward(input, (hidden, cell)) ---
    h1, (h1b, c1) = lstm_module_forward(x_seq[0], (h0, c0), w_x, w_h, b_all)
    h1_ref, c1_ref = lstm_ref_step(x_seq[0], h0, c0, params)
    assert jnp.allclose(h1, h1_ref, atol=1e-5, rtol=1e-5)
    assert jnp.allclose(c1, c1_ref, atol=1e-5, rtol=1e-5)

    # --- bf16 MXU operands + bf16 h_seq output (all generations, incl. v5e);
    #     accumulation, cell state and elementwise math stay f32 ---
    h_seq_bf, h_T_bf, c_T_bf = lstm_seq_pallas(
        x_seq, h0, c0, w_x, w_h, b_all,
        mxu_dtype=jnp.bfloat16, out_dtype=jnp.bfloat16, time_chunk=4)
    jax.block_until_ready((h_seq_bf, h_T_bf, c_T_bf))
    assert jnp.allclose(h_seq_bf, h_seq_ref, atol=5e-2, rtol=5e-2)
    assert jnp.allclose(c_T_bf, c_r, atol=5e-2, rtol=5e-2)

    print("KERNEL_OK")
</pallas_src>

<mosaic_0001>
module attributes {stable_mosaic.version = 11 : i64} {
  func.func @_lstm_rec_kernel(%arg0: i32, %arg1: i32, %arg2: memref<4x8x512xf32, #tpu.memory_space<vmem>>, %arg3: memref<8x128xf32, #tpu.memory_space<vmem>>, %arg4: memref<8x128xf32, #tpu.memory_space<vmem>>, %arg5: memref<128x512xf32, #tpu.memory_space<vmem>>, %arg6: memref<4x8x128xf32, #tpu.memory_space<vmem>>, %arg7: memref<8x128xf32, #tpu.memory_space<vmem>>, %arg8: memref<8x128xf32, #tpu.memory_space<vmem>>, %arg9: memref<8x128xf32, #tpu.memory_space<vmem>>) attributes {dimension_semantics = [#tpu.dimension_semantics<parallel>, #tpu.dimension_semantics<arbitrary>], iteration_bounds = array<i64: 1, 2>, scalar_prefetch = 0 : i64, scratch_operands = 2 : i64, tpu.core_type = #tpu.core_type<tc>, window_params = [{transform_indices = @transform_0, window_bounds = array<i64: 4, 8, 512>}, {pipeline_mode = #tpu.pipeline_mode<synchronous>, transform_indices = @transform_1, window_bounds = array<i64: 8, 128>}, {pipeline_mode = #tpu.pipeline_mode<synchronous>, transform_indices = @transform_2, window_bounds = array<i64: 8, 128>}, {pipeline_mode = #tpu.pipeline_mode<synchronous>, transform_indices = @transform_3, window_bounds = array<i64: 128, 512>}, {transform_indices = @transform_4, window_bounds = array<i64: 4, 8, 128>}, {transform_indices = @transform_5, window_bounds = array<i64: 8, 128>}]} {
    %c0_i32 = arith.constant 0 : i32
    %0 = arith.cmpi eq, %arg1, %c0_i32 : i32
    %1 = arith.extui %0 : i1 to i32
    %c0_i32_0 = arith.constant 0 : i32
    %2 = arith.cmpi ne, %1, %c0_i32_0 : i32
    scf.if %2 {
      %c0_47 = arith.constant 0 : index
      %c0_48 = arith.constant 0 : index
      %111 = vector.load %arg3[%c0_47, %c0_48] : memref<8x128xf32, #tpu.memory_space<vmem>>, vector<8x128xf32>
      %c0_49 = arith.constant 0 : index
      %c0_50 = arith.constant 0 : index
      %112 = vector.load %arg8[%c0_49, %c0_50] : memref<8x128xf32, #tpu.memory_space<vmem>>, vector<8x128xf32>
      tpu.vector_store %arg8[%c0_49, %c0_50], %111 {strides = array<i32>} : memref<8x128xf32, #tpu.memory_space<vmem>>, vector<8x128xf32>,
      %c0_51 = arith.constant 0 : index
      %c0_52 = arith.constant 0 : index
      %113 = vector.load %arg4[%c0_51, %c0_52] : memref<8x128xf32, #tpu.memory_space<vmem>>, vector<8x128xf32>
      %c0_53 = arith.constant 0 : index
      %c0_54 = arith.constant 0 : index
      %114 = vector.load %arg9[%c0_53, %c0_54] : memref<8x128xf32, #tpu.memory_space<vmem>>, vector<8x128xf32>
      tpu.vector_store %arg9[%c0_53, %c0_54], %113 {strides = array<i32>} : memref<8x128xf32, #tpu.memory_space<vmem>>, vector<8x128xf32>,
    } else {
    }
    %c0 = arith.constant 0 : index
    %c0_1 = arith.constant 0 : index
    %3 = vector.load %arg5[%c0, %c0_1] : memref<128x512xf32, #tpu.memory_space<vmem>>, vector<128x512xf32>
    %c0_2 = arith.constant 0 : index
    %c0_3 = arith.constant 0 : index
    %4 = vector.load %arg8[%c0_2, %c0_3] : memref<8x128xf32, #tpu.memory_space<vmem>>, vector<8x128xf32>
    %c0_4 = arith.constant 0 : index
    %c0_5 = arith.constant 0 : index
    %5 = vector.load %arg9[%c0_4, %c0_5] : memref<8x128xf32, #tpu.memory_space<vmem>>, vector<8x128xf32>
    %c0_6 = arith.constant 0 : index
    %c0_7 = arith.constant 0 : index
    %c0_8 = arith.constant 0 : index
    %6 = vector.load %arg2[%c0_6, %c0_7, %c0_8] : memref<4x8x512xf32, #tpu.memory_space<vmem>>, vector<1x8x512xf32>
    %7 = vector.shape_cast %6 : vector<1x8x512xf32> to vector<8x512xf32>
    %cst = arith.constant dense<0.000000e+00> : vector<8x512xf32>
    %8 = tpu.matmul %4, %3, %cst {dimension_numbers = #tpu.dot_dimension_numbers<[1], [0], [0], [1], [0, 0, 1, 1], [], []>} : vector<8x128xf32>, vector<128x512xf32>, vector<8x512xf32> -> vector<8x512xf32>
    %9 = arith.addf %7, %8 : vector<8x512xf32>
    %10 = vector.extract_strided_slice %9 {offsets = [0, 0], sizes = [8, 384], strides = [1, 1]} : vector<8x512xf32> to vector<8x384xf32>
    %cst_9 = arith.constant 5.000000e-01 : f32
    %11 = vector.broadcast %cst_9 : f32 to vector<8x384xf32>
    %12 = arith.mulf %11, %10 : vector<8x384xf32>
    %13 = math.tanh %12 : vector<8x384xf32>
    %cst_10 = arith.constant 5.000000e-01 : f32
    %14 = vector.broadcast %cst_10 : f32 to vector<8x384xf32>
    %15 = arith.mulf %14, %13 : vector<8x384xf32>
    %cst_11 = arith.constant 5.000000e-01 : f32
    %16 = vector.broadcast %cst_11 : f32 to vector<8x384xf32>
    %17 = arith.addf %15, %16 : vector<8x384xf32>
    %18 = vector.extract_strided_slice %9 {offsets = [0, 384], sizes = [8, 128], strides = [1, 1]} : vector<8x512xf32> to vector<8x128xf32>
    %19 = math.tanh %18 : vector<8x128xf32>
    %20 = vector.extract_strided_slice %17 {offsets = [0, 0], sizes = [8, 128], strides = [1, 1]} : vector<8x384xf32> to vector<8x128xf32>
    %21 = vector.extract_strided_slice %17 {offsets = [0, 128], sizes = [8, 128], strides = [1, 1]} : vector<8x384xf32> to vector<8x128xf32>
    %22 = vector.extract_strided_slice %17 {offsets = [0, 256], sizes = [8, 128], strides = [1, 1]} : vector<8x384xf32> to vector<8x128xf32>
    %23 = arith.mulf %5, %20 : vector<8x128xf32>
    %24 = arith.mulf %21, %19 : vector<8x128xf32>
    %25 = arith.addf %23, %24 : vector<8x128xf32>
    %26 = math.tanh %25 : vector<8x128xf32>
    %27 = arith.mulf %26, %22 : vector<8x128xf32>
    %c0_12 = arith.constant 0 : index
    %c0_13 = arith.constant 0 : index
    %c0_14 = arith.constant 0 : index
    %28 = vector.load %arg6[%c0_12, %c0_13, %c0_14] : memref<4x8x128xf32, #tpu.memory_space<vmem>>, vector<1x8x128xf32>
    %29 = vector.shape_cast %28 : vector<1x8x128xf32> to vector<8x128xf32>
    %30 = vector.shape_cast %27 : vector<8x128xf32> to vector<1x8x128xf32>
    tpu.vector_store %arg6[%c0_12, %c0_13, %c0_14], %30 {strides = array<i32>} : memref<4x8x128xf32, #tpu.memory_space<vmem>>, vector<1x8x128xf32>,
    %c1 = arith.constant 1 : index
    %c0_15 = arith.constant 0 : index
    %c0_16 = arith.constant 0 : index
    %31 = vector.load %arg2[%c1, %c0_15, %c0_16] : memref<4x8x512xf32, #tpu.memory_space<vmem>>, vector<1x8x512xf32>
    %32 = vector.shape_cast %31 : vector<1x8x512xf32> to vector<8x512xf32>
    %cst_17 = arith.constant dense<0.000000e+00> : vector<8x512xf32>
    %33 = tpu.matmul %27, %3, %cst_17 {dimension_numbers = #tpu.dot_dimension_numbers<[1], [0], [0], [1], [0, 0, 1, 1], [], []>} : vector<8x128xf32>, vector<128x512xf32>, vector<8x512xf32> -> vector<8x512xf32>
    %34 = arith.addf %32, %33 : vector<8x512xf32>
    %35 = vector.extract_strided_slice %34 {offsets = [0, 0], sizes = [8, 384], strides = [1, 1]} : vector<8x512xf32> to vector<8x384xf32>
    %cst_18 = arith.constant 5.000000e-01 : f32
    %36 = vector.broadcast %cst_18 : f32 to vector<8x384xf32>
    %37 = arith.mulf %36, %35 : vector<8x384xf32>
    %38 = math.tanh %37 : vector<8x384xf32>
    %cst_19 = arith.constant 5.000000e-01 : f32
    %39 = vector.broadcast %cst_19 : f32 to vector<8x384xf32>
    %40 = arith.mulf %39, %38 : vector<8x384xf32>
    %cst_20 = arith.constant 5.000000e-01 : f32
    %41 = vector.broadcast %cst_20 : f32 to vector<8x384xf32>
    %42 = arith.addf %40, %41 : vector<8x384xf32>
    %43 = vector.extract_strided_slice %34 {offsets = [0, 384], sizes = [8, 128], strides = [1, 1]} : vector<8x512xf32> to vector<8x128xf32>
    %44 = math.tanh %43 : vector<8x128xf32>
    %45 = vector.extract_strided_slice %42 {offsets = [0, 0], sizes = [8, 128], strides = [1, 1]} : vector<8x384xf32> to vector<8x128xf32>
    %46 = vector.extract_strided_slice %42 {offsets = [0, 128], sizes = [8, 128], strides = [1, 1]} : vector<8x384xf32> to vector<8x128xf32>
    %47 = vector.extract_strided_slice %42 {offsets = [0, 256], sizes = [8, 128], strides = [1, 1]} : vector<8x384xf32> to vector<8x128xf32>
    %48 = arith.mulf %25, %45 : vector<8x128xf32>
    %49 = arith.mulf %46, %44 : vector<8x128xf32>
    %50 = arith.addf %48, %49 : vector<8x128xf32>
    %51 = math.tanh %50 : vector<8x128xf32>
    %52 = arith.mulf %51, %47 : vector<8x128xf32>
    %c1_21 = arith.constant 1 : index
    %c0_22 = arith.constant 0 : index
    %c0_23 = arith.constant 0 : index
    %53 = vector.load %arg6[%c1_21, %c0_22, %c0_23] : memref<4x8x128xf32, #tpu.memory_space<vmem>>, vector<1x8x128xf32>
    %54 = vector.shape_cast %53 : vector<1x8x128xf32> to vector<8x128xf32>
    %55 = vector.shape_cast %52 : vector<8x128xf32> to vector<1x8x128xf32>
    tpu.vector_store %arg6[%c1_21, %c0_22, %c0_23], %55 {strides = array<i32>} : memref<4x8x128xf32, #tpu.memory_space<vmem>>, vector<1x8x128xf32>,
    %c2 = arith.constant 2 : index
    %c0_24 = arith.constant 0 : index
    %c0_25 = arith.constant 0 : index
    %56 = vector.load %arg2[%c2, %c0_24, %c0_25] : memref<4x8x512xf32, #tpu.memory_space<vmem>>, vector<1x8x512xf32>
    %57 = vector.shape_cast %56 : vector<1x8x512xf32> to vector<8x512xf32>
    %cst_26 = arith.constant dense<0.000000e+00> : vector<8x512xf32>
    %58 = tpu.matmul %52, %3, %cst_26 {dimension_numbers = #tpu.dot_dimension_numbers<[1], [0], [0], [1], [0, 0, 1, 1], [], []>} : vector<8x128xf32>, vector<128x512xf32>, vector<8x512xf32> -> vector<8x512xf32>
    %59 = arith.addf %57, %58 : vector<8x512xf32>
    %60 = vector.extract_strided_slice %59 {offsets = [0, 0], sizes = [8, 384], strides = [1, 1]} : vector<8x512xf32> to vector<8x384xf32>
    %cst_27 = arith.constant 5.000000e-01 : f32
    %61 = vector.broadcast %cst_27 : f32 to vector<8x384xf32>
    %62 = arith.mulf %61, %60 : vector<8x384xf32>
    %63 = math.tanh %62 : vector<8x384xf32>
    %cst_28 = arith.constant 5.000000e-01 : f32
    %64 = vector.broadcast %cst_28 : f32 to vector<8x384xf32>
    %65 = arith.mulf %64, %63 : vector<8x384xf32>
    %cst_29 = arith.constant 5.000000e-01 : f32
    %66 = vector.broadcast %cst_29 : f32 to vector<8x384xf32>
    %67 = arith.addf %65, %66 : vector<8x384xf32>
    %68 = vector.extract_strided_slice %59 {offsets = [0, 384], sizes = [8, 128], strides = [1, 1]} : vector<8x512xf32> to vector<8x128xf32>
    %69 = math.tanh %68 : vector<8x128xf32>
    %70 = vector.extract_strided_slice %67 {offsets = [0, 0], sizes = [8, 128], strides = [1, 1]} : vector<8x384xf32> to vector<8x128xf32>
    %71 = vector.extract_strided_slice %67 {offsets = [0, 128], sizes = [8, 128], strides = [1, 1]} : vector<8x384xf32> to vector<8x128xf32>
    %72 = vector.extract_strided_slice %67 {offsets = [0, 256], sizes = [8, 128], strides = [1, 1]} : vector<8x384xf32> to vector<8x128xf32>
    %73 = arith.mulf %50, %70 : vector<8x128xf32>
    %74 = arith.mulf %71, %69 : vector<8x128xf32>
    %75 = arith.addf %73, %74 : vector<8x128xf32>
    %76 = math.tanh %75 : vector<8x128xf32>
    %77 = arith.mulf %76, %72 : vector<8x128xf32>
    %c2_30 = arith.constant 2 : index
    %c0_31 = arith.constant 0 : index
    %c0_32 = arith.constant 0 : index
    %78 = vector.load %arg6[%c2_30, %c0_31, %c0_32] : memref<4x8x128xf32, #tpu.memory_space<vmem>>, vector<1x8x128xf32>
    %79 = vector.shape_cast %78 : vector<1x8x128xf32> to vector<8x128xf32>
    %80 = vector.shape_cast %77 : vector<8x128xf32> to vector<1x8x128xf32>
    tpu.vector_store %arg6[%c2_30, %c0_31, %c0_32], %80 {strides = array<i32>} : memref<4x8x128xf32, #tpu.memory_space<vmem>>, vector<1x8x128xf32>,
    %c3 = arith.constant 3 : index
    %c0_33 = arith.constant 0 : index
    %c0_34 = arith.constant 0 : index
    %81 = vector.load %arg2[%c3, %c0_33, %c0_34] : memref<4x8x512xf32, #tpu.memory_space<vmem>>, vector<1x8x512xf32>
    %82 = vector.shape_cast %81 : vector<1x8x512xf32> to vector<8x512xf32>
    %cst_35 = arith.constant dense<0.000000e+00> : vector<8x512xf32>
    %83 = tpu.matmul %77, %3, %cst_35 {dimension_numbers = #tpu.dot_dimension_numbers<[1], [0], [0], [1], [0, 0, 1, 1], [], []>} : vector<8x128xf32>, vector<128x512xf32>, vector<8x512xf32> -> vector<8x512xf32>
    %84 = arith.addf %82, %83 : vector<8x512xf32>
    %85 = vector.extract_strided_slice %84 {offsets = [0, 0], sizes = [8, 384], strides = [1, 1]} : vector<8x512xf32> to vector<8x384xf32>
    %cst_36 = arith.constant 5.000000e-01 : f32
    %86 = vector.broadcast %cst_36 : f32 to vector<8x384xf32>
    %87 = arith.mulf %86, %85 : vector<8x384xf32>
    %88 = math.tanh %87 : vector<8x384xf32>
    %cst_37 = arith.constant 5.000000e-01 : f32
    %89 = vector.broadcast %cst_37 : f32 to vector<8x384xf32>
    %90 = arith.mulf %89, %88 : vector<8x384xf32>
    %cst_38 = arith.constant 5.000000e-01 : f32
    %91 = vector.broadcast %cst_38 : f32 to vector<8x384xf32>
    %92 = arith.addf %90, %91 : vector<8x384xf32>
    %93 = vector.extract_strided_slice %84 {offsets = [0, 384], sizes = [8, 128], strides = [1, 1]} : vector<8x512xf32> to vector<8x128xf32>
    %94 = math.tanh %93 : vector<8x128xf32>
    %95 = vector.extract_strided_slice %92 {offsets = [0, 0], sizes = [8, 128], strides = [1, 1]} : vector<8x384xf32> to vector<8x128xf32>
    %96 = vector.extract_strided_slice %92 {offsets = [0, 128], sizes = [8, 128], strides = [1, 1]} : vector<8x384xf32> to vector<8x128xf32>
    %97 = vector.extract_strided_slice %92 {offsets = [0, 256], sizes = [8, 128], strides = [1, 1]} : vector<8x384xf32> to vector<8x128xf32>
    %98 = arith.mulf %75, %95 : vector<8x128xf32>
    %99 = arith.mulf %96, %94 : vector<8x128xf32>
    %100 = arith.addf %98, %99 : vector<8x128xf32>
    %101 = math.tanh %100 : vector<8x128xf32>
    %102 = arith.mulf %101, %97 : vector<8x128xf32>
    %c3_39 = arith.constant 3 : index
    %c0_40 = arith.constant 0 : index
    %c0_41 = arith.constant 0 : index
    %103 = vector.load %arg6[%c3_39, %c0_40, %c0_41] : memref<4x8x128xf32, #tpu.memory_space<vmem>>, vector<1x8x128xf32>
    %104 = vector.shape_cast %103 : vector<1x8x128xf32> to vector<8x128xf32>
    %105 = vector.shape_cast %102 : vector<8x128xf32> to vector<1x8x128xf32>
    tpu.vector_store %arg6[%c3_39, %c0_40, %c0_41], %105 {strides = array<i32>} : memref<4x8x128xf32, #tpu.memory_space<vmem>>, vector<1x8x128xf32>,
    %c0_42 = arith.constant 0 : index
    %c0_43 = arith.constant 0 : index
    %106 = vector.load %arg8[%c0_42, %c0_43] : memref<8x128xf32, #tpu.memory_space<vmem>>, vector<8x128xf32>
    tpu.vector_store %arg8[%c0_42, %c0_43], %102 {strides = array<i32>} : memref<8x128xf32, #tpu.memory_space<vmem>>, vector<8x128xf32>,
    %c0_44 = arith.constant 0 : index
    %c0_45 = arith.constant 0 : index
    %107 = vector.load %arg9[%c0_44, %c0_45] : memref<8x128xf32, #tpu.memory_space<vmem>>, vector<8x128xf32>
    tpu.vector_store %arg9[%c0_44, %c0_45], %100 {strides = array<i32>} : memref<8x128xf32, #tpu.memory_space<vmem>>, vector<8x128xf32>,
    %c1_i32 = arith.constant 1 : i32
    %108 = arith.cmpi eq, %arg1, %c1_i32 : i32
    %109 = arith.extui %108 : i1 to i32
    %c0_i32_46 = arith.constant 0 : i32
    %110 = arith.cmpi ne, %109, %c0_i32_46 : i32
    scf.if %110 {
      %c0_47 = arith.constant 0 : index
      %c0_48 = arith.constant 0 : index
      %111 = vector.load %arg7[%c0_47, %c0_48] : memref<8x128xf32, #tpu.memory_space<vmem>>, vector<8x128xf32>
      tpu.vector_store %arg7[%c0_47, %c0_48], %100 {strides = array<i32>} : memref<8x128xf32, #tpu.memory_space<vmem>>, vector<8x128xf32>,
    } else {
    }
    return
  }
  func.func @transform_0(%arg0: i32, %arg1: i32) -> (i32, i32, i32) {
    %c0_i32 = arith.constant 0 : i32
    %c0_i32_0 = arith.constant 0 : i32
    return %arg1, %arg0, %c0_i32 : i32, i32, i32
  }
  func.func @transform_1(%arg0: i32, %arg1: i32) -> (i32, i32) {
    %c0_i32 = arith.constant 0 : i32
    %c0_i32_0 = arith.constant 0 : i32
    return %arg0, %c0_i32 : i32, i32
  }
  func.func @transform_2(%arg0: i32, %arg1: i32) -> (i32, i32) {
    %c0_i32 = arith.constant 0 : i32
    %c0_i32_0 = arith.constant 0 : i32
    return %arg0, %c0_i32 : i32, i32
  }
  func.func @transform_3(%arg0: i32, %arg1: i32) -> (i32, i32) {
    %c0_i32 = arith.constant 0 : i32
    %c0_i32_0 = arith.constant 0 : i32
    %c0_i32_1 = arith.constant 0 : i32
    return %c0_i32, %c0_i32_0 : i32, i32
  }
  func.func @transform_4(%arg0: i32, %arg1: i32) -> (i32, i32, i32) {
    %c0_i32 = arith.constant 0 : i32
    %c0_i32_0 = arith.constant 0 : i32
    return %arg1, %arg0, %c0_i32 : i32, i32, i32
  }
  func.func @transform_5(%arg0: i32, %arg1: i32) -> (i32, i32) {
    %c0_i32 = arith.constant 0 : i32
    %c0_i32_0 = arith.constant 0 : i32
    return %arg0, %c0_i32 : i32, i32
  }
}

</mosaic_0001>

<llo_original>
// kernel: tpu_custom_call.1
$region0: #{tpu_custom_call.1}
  #allocation0 [shape = 'u32[]', space=smem, size = 0x4, offset = 0x4, fixed_abs, tag = 'smem constant byte address 0x4 - core index']
  #allocation1 [shape = 'u32[144,128]{1,0:T(1,128)}', space=vmem, size = 0x12000, scoped, tag = 'internal scratch']
  #allocation2 [shape = 'f32[8,128]{1,0:T(8,128)}', space=vmem, size = 0x1000, scoped, tag = 'scratch operand']
  #allocation3 [shape = 'f32[8,128]{1,0:T(8,128)}', space=vmem, size = 0x1000, scoped, tag = 'scratch operand']
  %s0 = inlined_call_operand.hbm [shape: f32[8,8,512], index: 0, kind: input, shape index: {}]
  %s1 = inlined_call_operand.hbm [shape: f32[8,128], index: 1, kind: input, shape index: {}]
  %s2 = inlined_call_operand.hbm [shape: f32[8,128], index: 2, kind: input, shape index: {}]
  %s3 = inlined_call_operand.hbm [shape: f32[128,512], index: 3, kind: input, shape index: {}]
  %s4 = inlined_call_operand.hbm [shape: f32[8,8,128], index: 4, kind: output, shape index: {0}]
  %s5 = inlined_call_operand.hbm [shape: f32[8,128], index: 5, kind: output, shape index: {1}]
  %6 = xla_tuple %s4, %s5
  %s7 = sld [smem:[#allocation0]]
  $region81: #{tpu_custom_call.1} parent=0
    _
  %s9 = ssub.s32 1, %s7
  %s10 = scalar_select 0, %s9, %s7
  $region1: #{tpu_custom_call.1} parent=0
    #allocation4 [shape = 'u8[131072]{0}', space=vmem, size = 0x20000, scoped, tag = 'input window, operand 0']
    #allocation5 [shape = 's32[2]{0}', space=sflag, size = 0x8, scoped, tag = 'scoped memory for tpu_custom_call.1']
    #allocation6 [shape = 's32[2]{0}', space=sflag, size = 0x8, scoped, tag = 'scoped memory for tpu_custom_call.1']
    #allocation7 [shape = 'u8[4096]{0}', space=vmem, size = 0x1000, scoped, tag = 'input window, operand 1, single buffered']
    #allocation8 [shape = 's32[1]{0}', space=sflag, size = 0x4, scoped, tag = 'scoped memory for tpu_custom_call.1']
    #allocation9 [shape = 'u8[4096]{0}', space=vmem, size = 0x1000, scoped, tag = 'input window, operand 2, single buffered']
    #allocation10 [shape = 'u8[262144]{0}', space=vmem, size = 0x40000, scoped, tag = 'input window, operand 3, single buffered']
    #allocation11 [shape = 's32[1]{0}', space=sflag, size = 0x4, scoped, tag = 'scoped memory for tpu_custom_call.1']
    #allocation12 [shape = 'u8[32768]{0}', space=vmem, size = 0x8000, scoped, tag = 'output window, operand 0']
    #allocation13 [shape = 'u8[4096]{0}', space=vmem, size = 0x1000, scoped, tag = 'output window, operand 1, single buffered']
    #allocation14 [shape = 's32[1]{0}', space=sflag, size = 0x4, scoped, tag = 'scoped memory for tpu_custom_call.1']
    %11 = vsyncpa [#allocation5], 0
    %s12 = scalar_lea.sflag [#allocation5], 1
    %13 = vsyncpa %s12, 0
    %14 = vsyncpa [#allocation8], 0
    %15 = vsyncpa [#allocation11], 0
    %16 = vsyncpa [#allocation6], 0
    %s17 = scalar_lea.sflag [#allocation6], 1
    %18 = vsyncpa %s17, 0
    %19 = vsyncpa [#allocation14], 0
    loop: start=0, step=1, limit=4
    $region2: #{tpu_custom_call.1} parent=1 // loop_pre_header
      _
    $region3: #{tpu_custom_call.1} parent=1 // loop_header
      %s21 = sphi 0, %s25
      %p22 = scmp.ge.s32.totalorder %s21, 4
      %s28 = sphi 0, %s40
      %s29 = sphi 0, %s36
      %s30 = sphi 0, %s28
      %s31 = sphi 0, %s29
      %s32 = sphi 0, %s30
      %s33 = sphi 0, %s31
      %s45 = sphi 0, %s47
      %s48 = sphi 0, %s45
      %s49 = sphi 0, %s48
      %s65 = sphi 0, %s49
      %s71 = sphi 0, %s73
      %s74 = sphi 0, %s71
      %s75 = sphi 0, %s74
      %s91 = sphi 0, %s75
      %s97 = sphi 0, %s99
      %s100 = sphi 0, %s97
      %s101 = sphi 0, %s100
      %s117 = sphi 0, %s101
      %s121 = sphi 0, %s121
      %s123 = sphi 0, %s121
      %s124 = sphi 0, %s123
      %s138 = sphi 0, %s124
      %s146 = sphi 0, %s148
      %s149 = sphi 0, %s146
      %s150 = sphi 0, %s149
      %s166 = sphi 0, %s150
      %s172 = sphi 0, %s174
      %s175 = sphi 0, %s172
      %s176 = sphi 0, %s175
      %s192 = sphi 0, %s176
    $region4: #{tpu_custom_call.1} parent=1 // loop_header_branch
      %24 = sbr.rel (%p22) target = $region8
    $region5: #{tpu_custom_call.1} parent=1 // loop_body
      %s26 = ssub.s32 %s21, 1
      %s27 = ssub.s32 %s21, 2
      %s34 = sadd.s32 1, %s29
      %p35 = scmp.ge.s32.totalorder %s34, 2
      %s36 = scalar_select %p35, 0, %s34
      %s37 = sadd.s32 1, %s28
      %s38 = scalar_select %p35, %s37, %s28
      %p39 = scmp.ge.s32.totalorder %s38, 1
      %s40 = scalar_select %p39, 0, %s38
      %s41 = ssub.s32 %s29, %s36
      %s42 = ssub.s32 %s28, %s40
      %s43 = sor.u32 %s41, %s42
      %p44 = scmp.eq.s32.totalorder %s43, 0
      %s46 = sadd.s32 %s45, 1
      %s47 = scalar_select %p44, %s45, %s46
      %p50 = pneg %p44
      %p51 = scmp.eq.s32.totalorder %s21, 1
      %p52 = por %p50, %p51
      %p53 = scmp.ne.s32.totalorder %s45, %s48
      %p54 = scmp.eq.s32.totalorder %s21, 0
      %p55 = por %p53, %p54
      %p56 = scmp.ne.s32.totalorder %s45, %s48
      %p57 = scmp.eq.s32.totalorder %s26, 1
      %p58 = por %p56, %p57
      %p59 = scmp.ne.s32.totalorder %s48, %s49
      %p60 = scmp.eq.s32.totalorder %s26, 0
      %p61 = por %p59, %p60
      %p62 = scmp.ne.s32.totalorder %s48, %s49
      %p63 = scmp.eq.s32.totalorder %s27, 1
      %p64 = por %p62, %p63
      %p66 = scmp.ne.s32.totalorder %s49, %s65
      %p67 = scmp.eq.s32.totalorder %s27, 0
      %p68 = por %p66, %p67
      %s69 = ssub.s32 %s28, %s40
      %p70 = scmp.eq.s32.totalorder %s69, 0
      %s72 = sadd.s32 %s71, 1
      %s73 = scalar_select %p70, %s71, %s72
      %p76 = pneg %p70
      %p77 = scmp.eq.s32.totalorder %s21, 1
      %p78 = por %p76, %p77
      %p79 = scmp.ne.s32.totalorder %s71, %s74
      %p80 = scmp.eq.s32.totalorder %s21, 0
      %p81 = por %p79, %p80
      %p82 = scmp.ne.s32.totalorder %s71, %s74
      %p83 = scmp.eq.s32.totalorder %s26, 1
      %p84 = por %p82, %p83
      %p85 = scmp.ne.s32.totalorder %s74, %s75
      %p86 = scmp.eq.s32.totalorder %s26, 0
      %p87 = por %p85, %p86
      %p88 = scmp.ne.s32.totalorder %s74, %s75
      %p89 = scmp.eq.s32.totalorder %s27, 1
      %p90 = por %p88, %p89
      %p92 = scmp.ne.s32.totalorder %s75, %s91
      %p93 = scmp.eq.s32.totalorder %s27, 0
      %p94 = por %p92, %p93
      %s95 = ssub.s32 %s28, %s40
      %p96 = scmp.eq.s32.totalorder %s95, 0
      %s98 = sadd.s32 %s97, 1
      %s99 = scalar_select %p96, %s97, %s98
      %p102 = pneg %p96
      %p103 = scmp.eq.s32.totalorder %s21, 1
      %p104 = por %p102, %p103
      %p105 = scmp.ne.s32.totalorder %s97, %s100
      %p106 = scmp.eq.s32.totalorder %s21, 0
      %p107 = por %p105, %p106
      %p108 = scmp.ne.s32.totalorder %s97, %s100
      %p109 = scmp.eq.s32.totalorder %s26, 1
      %p110 = por %p108, %p109
      %p111 = scmp.ne.s32.totalorder %s100, %s101
      %p112 = scmp.eq.s32.totalorder %s26, 0
      %p113 = por %p111, %p112
      %p114 = scmp.ne.s32.totalorder %s100, %s101
      %p115 = scmp.eq.s32.totalorder %s27, 1
      %p116 = por %p114, %p115
      %p118 = scmp.ne.s32.totalorder %s101, %s117
      %p119 = scmp.eq.s32.totalorder %s27, 0
      %p120 = por %p118, %p119
      %s122 = sadd.s32 %s121, 1
      %p125 = scmp.eq.s32.totalorder %s21, 1
      %p126 = scmp.ne.s32.totalorder %s121, %s123
      %p127 = scmp.eq.s32.totalorder %s21, 0
      %p128 = por %p126, %p127
      %p129 = scmp.ne.s32.totalorder %s121, %s123
      %p130 = scmp.eq.s32.totalorder %s26, 1
      %p131 = por %p129, %p130
      %p132 = scmp.ne.s32.totalorder %s123, %s124
      %p133 = scmp.eq.s32.totalorder %s26, 0
      %p134 = por %p132, %p133
      %p135 = scmp.ne.s32.totalorder %s123, %s124
      %p136 = scmp.eq.s32.totalorder %s27, 1
      %p137 = por %p135, %p136
      %p139 = scmp.ne.s32.totalorder %s124, %s138
      %p140 = scmp.eq.s32.totalorder %s27, 0
      %p141 = por %p139, %p140
      %s142 = ssub.s32 %s29, %s36
      %s143 = ssub.s32 %s28, %s40
      %s144 = sor.u32 %s142, %s143
      %p145 = scmp.eq.s32.totalorder %s144, 0
      %s147 = sadd.s32 %s146, 1
      %s148 = scalar_select %p145, %s146, %s147
      %p151 = pneg %p145
      %p152 = scmp.eq.s32.totalorder %s21, 1
      %p153 = por %p151, %p152
      %p154 = scmp.ne.s32.totalorder %s146, %s149
      %p155 = scmp.eq.s32.totalorder %s21, 0
      %p156 = por %p154, %p155
      %p157 = scmp.ne.s32.totalorder %s146, %s149
      %p158 = scmp.eq.s32.totalorder %s26, 1
      %p159 = por %p157, %p158
      %p160 = scmp.ne.s32.totalorder %s149, %s150
      %p161 = scmp.eq.s32.totalorder %s26, 0
      %p162 = por %p160, %p161
      %p163 = scmp.ne.s32.totalorder %s149, %s150
      %p164 = scmp.eq.s32.totalorder %s27, 1
      %p165 = por %p163, %p164
      %p167 = scmp.ne.s32.totalorder %s150, %s166
      %p168 = scmp.eq.s32.totalorder %s27, 0
      %p169 = por %p167, %p168
      %s170 = ssub.s32 %s28, %s40
      %p171 = scmp.eq.s32.totalorder %s170, 0
      %s173 = sadd.s32 %s172, 1
      %s174 = scalar_select %p171, %s172, %s173
      %p177 = pneg %p171
      %p178 = scmp.eq.s32.totalorder %s21, 1
      %p179 = por %p177, %p178
      %p180 = scmp.ne.s32.totalorder %s172, %s175
      %p181 = scmp.eq.s32.totalorder %s21, 0
      %p182 = por %p180, %p181
      %p183 = scmp.ne.s32.totalorder %s172, %s175
      %p184 = scmp.eq.s32.totalorder %s26, 1
      %p185 = por %p183, %p184
      %p186 = scmp.ne.s32.totalorder %s175, %s176
      %p187 = scmp.eq.s32.totalorder %s26, 0
      %p188 = por %p186, %p187
      %p189 = scmp.ne.s32.totalorder %s175, %s176
      %p190 = scmp.eq.s32.totalorder %s27, 1
      %p191 = por %p189, %p190
      %p193 = scmp.ne.s32.totalorder %s176, %s192
      %p194 = scmp.eq.s32.totalorder %s27, 0
      %p195 = por %p193, %p194
      %p196 = scmp.le.s32.totalorder 1, %s21
      %p197 = scmp.lt.s32.totalorder %s21, 3
      %p198 = pnand %p196, %p197
      %p199 = pneg %p198
      // Predicated region
      $region9: #{tpu_custom_call.1} parent=5 // pred_check
        _
      $region10: #{tpu_custom_call.1} parent=5 // pred_check_branch
        %201 = sbr.rel (%p198) target = $region12
      $region11: #{tpu_custom_call.1} parent=5 // pred_region
        %s202 = ssub.s32 %s21, 1
        // Predicated region
        $region13: #{tpu_custom_call.1} parent=11 // pred_check
          %p203 = pneg %p87
        $region14: #{tpu_custom_call.1} parent=11 // pred_check_branch
          %205 = sbr.rel (%p203) target = $region16
        $region15: #{tpu_custom_call.1} parent=11 // pred_region
          %s207 = ssub.s32 128, 128
          %208 = vsyncadd [#allocation8], %s207
          %s209 = smul.addr %s30, 128
          %s210 = scalar_lea.hbm %s1, %s209
          %s212 = sshll.u32 [#allocation7], 4
          %s213 = int_to_ptr.vmem [resolvable:$true] %s212
          %215 = dma.hbm_to_vmem [thread:$0]  %s210, 128, %s213, [#allocation8]
        $region16: #{tpu_custom_call.1} parent=11 // pred_fallthru
          _
        // Predicated region
        $region17: #{tpu_custom_call.1} parent=11 // pred_check
          %p216 = pneg %p113
        $region18: #{tpu_custom_call.1} parent=11 // pred_check_branch
          %218 = sbr.rel (%p216) target = $region20
        $region19: #{tpu_custom_call.1} parent=11 // pred_region
          %s220 = ssub.s32 128, 128
          %221 = vsyncadd [#allocation8], %s220
          %s222 = smul.addr %s30, 128
          %s223 = scalar_lea.hbm %s2, %s222
          %s225 = sshll.u32 [#allocation9], 4
          %s226 = int_to_ptr.vmem [resolvable:$true] %s225
          %228 = dma.hbm_to_vmem [thread:$0]  %s223, 128, %s226, [#allocation8]
        $region20: #{tpu_custom_call.1} parent=11 // pred_fallthru
          _
        // Predicated region
        $region21: #{tpu_custom_call.1} parent=11 // pred_check
          %p229 = pneg %p134
        $region22: #{tpu_custom_call.1} parent=11 // pred_check_branch
          %231 = sbr.rel (%p229) target = $region24
        $region23: #{tpu_custom_call.1} parent=11 // pred_region
          %s233 = ssub.s32 8192, 8192
          %234 = vsyncadd [#allocation11], %s233
          %s235 = sshll.u32 [#allocation10], 4
          %s236 = int_to_ptr.vmem [resolvable:$true] %s235
          %241 = dma.hbm_to_vmem [thread:$0]  %s3, 8192, %s236, [#allocation11], 512, 512, 32
        $region24: #{tpu_custom_call.1} parent=11 // pred_fallthru
          _
      $region12: #{tpu_custom_call.1} parent=5 // pred_fallthru
        _
      %p242 = scmp.lt.s32.totalorder %s21, 2
      // Predicated region
      $region25: #{tpu_custom_call.1} parent=5 // pred_check
        %p243 = pneg %p242
      $region26: #{tpu_custom_call.1} parent=5 // pred_check_branch
        %245 = sbr.rel (%p243) target = $region28
      $region27: #{tpu_custom_call.1} parent=5 // pred_region
        // Predicated region
        $region29: #{tpu_custom_call.1} parent=27 // pred_check
          %p246 = pneg %p55
        $region30: #{tpu_custom_call.1} parent=27 // pred_check_branch
          %248 = sbr.rel (%p246) target = $region32
        $region31: #{tpu_custom_call.1} parent=27 // pred_region
          %s249 = sand.u32 %s45, 1
          %s250 = scalar_lea.sflag [#allocation5], %s249
          %s251 = sand.u32 %s45, 1
          %s252 = smul.addr %s251, 128
          %s253 = scalar_lea.vmem [#allocation4], %s252
          %s254 = smul.u32 4, %s29
          %s256 = ssub.s32 2048, 2048
          %257 = vsyncadd %s250, %s256
          %s258 = smul.addr %s28, 4
          %s259 = smul.addr %s254, 4
          %s260 = sadd.s32 %s258, %s259
          %s261 = smul.addr %s260, 128
          %s262 = scalar_lea.hbm %s0, %s261
          %s263 = sshll.u32 %s253, 4
          %s264 = int_to_ptr.vmem [resolvable:$true] %s263
          %269 = dma.hbm_to_vmem [thread:$0]  %s262, 2048, %s264, %s250, 512, 512, 32
        $region32: #{tpu_custom_call.1} parent=27 // pred_fallthru
          _
      $region28: #{tpu_custom_call.1} parent=5 // pred_fallthru
        _
      %p270 = scmp.le.s32.totalorder 1, %s21
      %p271 = scmp.lt.s32.totalorder %s21, 3
      %p272 = pnand %p270, %p271
      %p273 = pneg %p272
      // Predicated region
      $region33: #{tpu_custom_call.1} parent=5 // pred_check
        _
      $region34: #{tpu_custom_call.1} parent=5 // pred_check_branch
        %275 = sbr.rel (%p272) target = $region36
      $region35: #{tpu_custom_call.1} parent=5 // pred_region
        %s276 = ssub.s32 %s21, 1
        %s277 = sand.u32 %s48, 1
        %s278 = scalar_lea.sflag [#allocation5], %s277
        %s279 = sand.u32 %s48, 1
        %s280 = smul.addr %s279, 128
        %s281 = scalar_lea.vmem [#allocation4], %s280
        // Predicated region
        $region37: #{tpu_custom_call.1} parent=35 // pred_check
          %p282 = pneg %p61
        $region38: #{tpu_custom_call.1} parent=35 // pred_check_branch
          %284 = sbr.rel (%p282) target = $region40
        $region39: #{tpu_custom_call.1} parent=35 // pred_region
          %285 = dma.done %s278, 2048
        $region40: #{tpu_custom_call.1} parent=35 // pred_fallthru
          _
        // Predicated region
        $region41: #{tpu_custom_call.1} parent=35 // pred_check
          %p286 = pneg %p87
        $region42: #{tpu_custom_call.1} parent=35 // pred_check_branch
          %288 = sbr.rel (%p286) target = $region44
        $region43: #{tpu_custom_call.1} parent=35 // pred_region
          %289 = dma.done [#allocation8], 128
        $region44: #{tpu_custom_call.1} parent=35 // pred_fallthru
          _
        // Predicated region
        $region45: #{tpu_custom_call.1} parent=35 // pred_check
          %p290 = pneg %p113
        $region46: #{tpu_custom_call.1} parent=35 // pred_check_branch
          %292 = sbr.rel (%p290) target = $region48
        $region47: #{tpu_custom_call.1} parent=35 // pred_region
          %293 = dma.done [#allocation8], 128
        $region48: #{tpu_custom_call.1} parent=35 // pred_fallthru
          _
        // Predicated region
        $region49: #{tpu_custom_call.1} parent=35 // pred_check
          %p294 = pneg %p134
        $region50: #{tpu_custom_call.1} parent=35 // pred_check_branch
          %296 = sbr.rel (%p294) target = $region52
        $region51: #{tpu_custom_call.1} parent=35 // pred_region
          %297 = dma.done [#allocation11], 8192
        $region52: #{tpu_custom_call.1} parent=35 // pred_fallthru
          _
        %s298 = sand.u32 %s48, 1
        %s299 = scalar_lea.sflag [#allocation5], %s298
        %s300 = sand.u32 %s48, 1
        %s301 = smul.addr %s300, 128
        %s302 = scalar_lea.vmem [#allocation4], %s301
        %p303 = pneg %p61
        %p304 = pneg %p58
        %p305 = pneg %p87
        %p306 = pneg %p84
        %p307 = pneg %p113
        %p308 = pneg %p110
        %p309 = pneg %p134
        %p310 = pneg %p131
        %p311 = pneg %p162
        %p312 = pneg %p159
        %s313 = sand.u32 %s149, 1
        %s314 = scalar_lea.sflag [#allocation6], %s313
        %s315 = sand.u32 %s149, 1
        %s316 = smul.addr %s315, 32
        %s317 = scalar_lea.vmem [#allocation12], %s316
        %p318 = pneg %p188
        %p319 = pneg %p185
        %s320 = smul.u32 4, %s31
        %s321 = smul.u32 4, %s31
        %p322 = scmp.eq.s32.totalorder %s31, 0
        // Predicated region
        $region53: #{tpu_custom_call.1} parent=35 // pred_check
          %p323 = pneg %p322
        $region54: #{tpu_custom_call.1} parent=35 // pred_check_branch
          %325 = sbr.rel (%p323) target = $region56
        $region55: #{tpu_custom_call.1} parent=35 // pred_region
          %v326 = vld [vmem:[#allocation7] sm:$0xff]
          %327 = vst [vmem:[#allocation2] sm:$0xff] %v326
          %v328 = vld [vmem:[#allocation9] sm:$0xff]
          %329 = vst [vmem:[#allocation3] sm:$0xff] %v328
        $region56: #{tpu_custom_call.1} parent=35 // pred_fallthru
          _
        %v330 = vld [vmem:[#allocation10] sm:$0xff]
        %v331 = vld [vmem:[#allocation10 + $0x8] sm:$0xff]
        %v332 = vld [vmem:[#allocation10 + $0x10] sm:$0xff]
        %v333 = vld [vmem:[#allocation10 + $0x18] sm:$0xff]
        %v334 = vld [vmem:[#allocation10 + $0x20] sm:$0xff]
        %v335 = vld [vmem:[#allocation10 + $0x28] sm:$0xff]
        %v336 = vld [vmem:[#allocation10 + $0x30] sm:$0xff]
        %v337 = vld [vmem:[#allocation10 + $0x38] sm:$0xff]
        %v338 = vld [vmem:[#allocation10 + $0x40] sm:$0xff]
        %v339 = vld [vmem:[#allocation10 + $0x48] sm:$0xff]
        %v340 = vld [vmem:[#allocation10 + $0x50] sm:$0xff]
        %v341 = vld [vmem:[#allocation10 + $0x58] sm:$0xff]
        %v342 = vld [vmem:[#allocation10 + $0x60] sm:$0xff]
        %v343 = vld [vmem:[#allocation10 + $0x68] sm:$0xff]
        %v344 = vld [vmem:[#allocation10 + $0x70] sm:$0xff]
        %v345 = vld [vmem:[#allocation10 + $0x78] sm:$0xff]
        %v346 = vld [vmem:[#allocation10 + $0x80] sm:$0xff]
        %v347 = vld [vmem:[#allocation10 + $0x88] sm:$0xff]
        %v348 = vld [vmem:[#allocation10 + $0x90] sm:$0xff]
        %v349 = vld [vmem:[#allocation10 + $0x98] sm:$0xff]
        %v350 = vld [vmem:[#allocation10 + $0xa0] sm:$0xff]
        %v351 = vld [vmem:[#allocation10 + $0xa8] sm:$0xff]
        %v352 = vld [vmem:[#allocation10 + $0xb0] sm:$0xff]
        %v353 = vld [vmem:[#allocation10 + $0xb8] sm:$0xff]
        %v354 = vld [vmem:[#allocation10 + $0xc0] sm:$0xff]
        %v355 = vld [vmem:[#allocation10 + $0xc8] sm:$0xff]
        %v356 = vld [vmem:[#allocation10 + $0xd0] sm:$0xff]
        %v357 = vld [vmem:[#allocation10 + $0xd8] sm:$0xff]
        %v358 = vld [vmem:[#allocation10 + $0xe0] sm:$0xff]
        %v359 = vld [vmem:[#allocation10 + $0xe8] sm:$0xff]
        %v360 = vld [vmem:[#allocation10 + $0xf0] sm:$0xff]
        %v361 = vld [vmem:[#allocation10 + $0xf8] sm:$0xff]
        %v362 = vld [vmem:[#allocation10 + $0x100] sm:$0xff]
        %v363 = vld [vmem:[#allocation10 + $0x108] sm:$0xff]
        %v364 = vld [vmem:[#allocation10 + $0x110] sm:$0xff]
        %v365 = vld [vmem:[#allocation10 + $0x118] sm:$0xff]
        %v366 = vld [vmem:[#allocation10 + $0x120] sm:$0xff]
        %v367 = vld [vmem:[#allocation10 + $0x128] sm:$0xff]
        %v368 = vld [vmem:[#allocation10 + $0x130] sm:$0xff]
        %v369 = vld [vmem:[#allocation10 + $0x138] sm:$0xff]
        %v370 = vld [vmem:[#allocation10 + $0x140] sm:$0xff]
        %v371 = vld [vmem:[#allocation10 + $0x148] sm:$0xff]
        %v372 = vld [vmem:[#allocation10 + $0x150] sm:$0xff]
        %v373 = vld [vmem:[#allocation10 + $0x158] sm:$0xff]
        %v374 = vld [vmem:[#allocation10 + $0x160] sm:$0xff]
        %v375 = vld [vmem:[#allocation10 + $0x168] sm:$0xff]
        %v376 = vld [vmem:[#allocation10 + $0x170] sm:$0xff]
        %v377 = vld [vmem:[#allocation10 + $0x178] sm:$0xff]
        %v378 = vld [vmem:[#allocation10 + $0x180] sm:$0xff]
        %v379 = vld [vmem:[#allocation10 + $0x188] sm:$0xff]
        %v380 = vld [vmem:[#allocation10 + $0x190] sm:$0xff]
        %v381 = vld [vmem:[#allocation10 + $0x198] sm:$0xff]
        %v382 = vld [vmem:[#allocation10 + $0x1a0] sm:$0xff]
        %v383 = vld [vmem:[#allocation10 + $0x1a8] sm:$0xff]
        %v384 = vld [vmem:[#allocation10 + $0x1b0] sm:$0xff]
        %v385 = vld [vmem:[#allocation10 + $0x1b8] sm:$0xff]
        %v386 = vld [vmem:[#allocation10 + $0x1c0] sm:$0xff]
        %v387 = vld [vmem:[#allocation10 + $0x1c8] sm:$0xff]
        %v388 = vld [vmem:[#allocation10 + $0x1d0] sm:$0xff]
        %v389 = vld [vmem:[#allocation10 + $0x1d8] sm:$0xff]
        %v390 = vld [vmem:[#allocation10 + $0x1e0] sm:$0xff]
        %v391 = vld [vmem:[#allocation10 + $0x1e8] sm:$0xff]
        %v392 = vld [vmem:[#allocation10 + $0x1f0] sm:$0xff]
        %v393 = vld [vmem:[#allocation10 + $0x1f8] sm:$0xff]
        %v394 = vld [vmem:[#allocation2] sm:$0xff]
        %v395 = vld [vmem:[#allocation3] sm:$0xff]
        %v396 = vld [vmem:[%s281] sm:$0xff]
        %v397 = vld [vmem:[%s281 + $0x8] sm:$0xff]
        %v398 = vld [vmem:[%s281 + $0x10] sm:$0xff]
        %v399 = vld [vmem:[%s281 + $0x18] sm:$0xff]
        %400 = vmatprep.subr.mxu0 %v391
        %401 = vmatpush1.msra.mxu0 %v390
        %402 = vmatprep.subr.mxu0 %v387
        %403 = vmatpush1.msra.mxu0 %v386
        %404 = vmatprep.subr.mxu0 %v383
        %405 = vmatpush1.msra.mxu0 %v382
        %406 = vmatprep.subr.mxu0 %v379
        %407 = vmatpush1.msra.mxu0 %v378
        %408 = vmatprep.subr.mxu0 %v375
        %409 = vmatpush1.msra.mxu0 %v374
        %410 = vmatprep.subr.mxu0 %v371
        %411 = vmatpush1.msra.mxu0 %v370
        %412 = vmatprep.subr.mxu0 %v367
        %413 = vmatpush1.msra.mxu0 %v366
        %414 = vmatprep.subr.mxu0 %v363
        %415 = vmatpush1.msra.mxu0 %v362
        %416 = vmatprep.subr.mxu0 %v359
        %417 = vmatpush1.msra.mxu0 %v358
        %418 = vmatprep.subr.mxu0 %v355
        %419 = vmatpush1.msra.mxu0 %v354
        %420 = vmatprep.subr.mxu0 %v351
        %421 = vmatpush1.msra.mxu0 %v350
        %422 = vmatprep.subr.mxu0 %v347
        %423 = vmatpush1.msra.mxu0 %v346
        %424 = vmatprep.subr.mxu0 %v343
        %425 = vmatpush1.msra.mxu0 %v342
        %426 = vmatprep.subr.mxu0 %v339
        %427 = vmatpush1.msra.mxu0 %v338
        %428 = vmatprep.subr.mxu0 %v335
        %429 = vmatpush1.msra.mxu0 %v334
        %430 = vmatprep.subr.mxu0 %v331
        %431 = vmatpush1.msra.mxu0 %v330
        %432 = vmatprep.subr.mxu0 0.0
        %433 = vmatpush2.msra.mxu0 0.0
        %434 = vmatprep.subr.mxu0 0.0
        %435 = vmatpush2.msra.mxu0 0.0
        %436 = vmatprep.subr.mxu0 0.0
        %437 = vmatpush2.msra.mxu0 0.0
        %438 = vmatprep.subr.mxu0 0.0
        %439 = vmatpush2.msra.mxu0 0.0
        %440 = vmatprep.subr.mxu0 0.0
        %441 = vmatpush2.msra.mxu0 0.0
        %442 = vmatprep.subr.mxu0 0.0
        %443 = vmatpush2.msra.mxu0 0.0
        %444 = vmatprep.subr.mxu0 0.0
        %445 = vmatpush2.msra.mxu0 0.0
        %446 = vmatprep.subr.mxu0 0.0
        %447 = vmatpush2.msra.mxu0 0.0
        %448 = vmatprep.subr.mxu0 0.0
        %449 = vmatpush2.msra.mxu0 0.0
        %450 = vmatprep.subr.mxu0 0.0
        %451 = vmatpush2.msra.mxu0 0.0
        %452 = vmatprep.subr.mxu0 0.0
        %453 = vmatpush2.msra.mxu0 0.0
        %454 = vmatprep.subr.mxu0 0.0
        %455 = vmatpush2.msra.mxu0 0.0
        %456 = vmatprep.subr.mxu0 0.0
        %457 = vmatpush2.msra.mxu0 0.0
        %458 = vmatprep.subr.mxu0 0.0
        %459 = vmatpush2.msra.mxu0 0.0
        %460 = vmatprep.subr.mxu0 0.0
        %461 = vmatpush2.msra.mxu0 0.0
        %462 = vmatprep.subr.mxu0 0.0
        %463 = vmatpush2.msra.mxu0 0.0
        %464 = vmatprep.mubr.f32.mxu0 0.0
        %465 = vmatmul.mubr.f32.gmra.mxu0 %v394
        %v466 = vpop.f32.mrf.mxu0
        %v467 = vadd.f32 0.0, %v466
        %v468 = vpop.f32.mrf.mxu0
        %v469 = vadd.f32 0.0, %v468
        %470 = vdwg.mxu0
        %471 = vmatprep.subr.mxu0 %v393
        %472 = vmatpush1.msra.mxu0 %v392
        %473 = vmatprep.subr.mxu0 %v389
        %474 = vmatpush1.msra.mxu0 %v388
        %475 = vmatprep.subr.mxu0 %v385
        %476 = vmatpush1.msra.mxu0 %v384
        %477 = vmatprep.subr.mxu0 %v381
        %478 = vmatpush1.msra.mxu0 %v380
        %479 = vmatprep.subr.mxu0 %v377
        %480 = vmatpush1.msra.mxu0 %v376
        %481 = vmatprep.subr.mxu0 %v373
        %482 = vmatpush1.msra.mxu0 %v372
        %483 = vmatprep.subr.mxu0 %v369
        %484 = vmatpush1.msra.mxu0 %v368
        %485 = vmatprep.subr.mxu0 %v365
        %486 = vmatpush1.msra.mxu0 %v364
        %487 = vmatprep.subr.mxu0 %v361
        %488 = vmatpush1.msra.mxu0 %v360
        %489 = vmatprep.subr.mxu0 %v357
        %490 = vmatpush1.msra.mxu0 %v356
        %491 = vmatprep.subr.mxu0 %v353
        %492 = vmatpush1.msra.mxu0 %v352
        %493 = vmatprep.subr.mxu0 %v349
        %494 = vmatpush1.msra.mxu0 %v348
        %495 = vmatprep.subr.mxu0 %v345
        %496 = vmatpush1.msra.mxu0 %v344
        %497 = vmatprep.subr.mxu0 %v341
        %498 = vmatpush1.msra.mxu0 %v340
        %499 = vmatprep.subr.mxu0 %v337
        %500 = vmatpush1.msra.mxu0 %v336
        %501 = vmatprep.subr.mxu0 %v333
        %502 = vmatpush1.msra.mxu0 %v332
        %503 = vmatprep.subr.mxu0 0.0
        %504 = vmatpush2.msra.mxu0 0.0
        %505 = vmatprep.subr.mxu0 0.0
        %506 = vmatpush2.msra.mxu0 0.0
        %507 = vmatprep.subr.mxu0 0.0
        %508 = vmatpush2.msra.mxu0 0.0
        %509 = vmatprep.subr.mxu0 0.0
        %510 = vmatpush2.msra.mxu0 0.0
        %511 = vmatprep.subr.mxu0 0.0
        %512 = vmatpush2.msra.mxu0 0.0
        %513 = vmatprep.subr.mxu0 0.0
        %514 = vmatpush2.msra.mxu0 0.0
        %515 = vmatprep.subr.mxu0 0.0
        %516 = vmatpush2.msra.mxu0 0.0
        %517 = vmatprep.subr.mxu0 0.0
        %518 = vmatpush2.msra.mxu0 0.0
        %519 = vmatprep.subr.mxu0 0.0
        %520 = vmatpush2.msra.mxu0 0.0
        %521 = vmatprep.subr.mxu0 0.0
        %522 = vmatpush2.msra.mxu0 0.0
        %523 = vmatprep.subr.mxu0 0.0
        %524 = vmatpush2.msra.mxu0 0.0
        %525 = vmatprep.subr.mxu0 0.0
        %526 = vmatpush2.msra.mxu0 0.0
        %527 = vmatprep.subr.mxu0 0.0
        %528 = vmatpush2.msra.mxu0 0.0
        %529 = vmatprep.subr.mxu0 0.0
        %530 = vmatpush2.msra.mxu0 0.0
        %531 = vmatprep.subr.mxu0 0.0
        %532 = vmatpush2.msra.mxu0 0.0
        %533 = vmatprep.subr.mxu0 0.0
        %534 = vmatpush2.msra.mxu0 0.0
        %535 = vmatprep.mubr.f32.mxu0 0.0
        %536 = vmatmul.mubr.f32.gmra.mxu0 %v394
        %v537 = vpop.f32.mrf.mxu0
        %v538 = vadd.f32 0.0, %v537
        %v539 = vpop.f32.mrf.mxu0
        %v540 = vadd.f32 0.0, %v539
        %541 = vdwg.mxu0
        %v542 = vadd.f32 %v396, %v467
        %v543 = vadd.f32 %v397, %v469
        %v544 = vadd.f32 %v398, %v538
        %v545 = vadd.f32 %v399, %v540
        %v546 = vmul.f32 %v542, 0.5
        %v547 = vmul.f32 %v543, 0.5
        %v548 = vmul.f32 %v544, 0.5
        %v549 = vtanh.pop %v546
        %v550 = vtanh.pop %v547
        %v551 = vtanh.pop %v548
        %v552 = vmul.f32 %v549, 0.5
        %v553 = vmul.f32 %v550, 0.5
        %v554 = vmul.f32 %v551, 0.5
        %v555 = vadd.f32 %v552, 0.5
        %v556 = vadd.f32 %v553, 0.5
        %v557 = vadd.f32 %v554, 0.5
        %v558 = vtanh.pop %v545
        %v559 = vmul.f32 %v395, %v555
        %v560 = vmul.f32 %v556, %v558
        %v561 = vadd.f32 %v559, %v560
        %v562 = vtanh.pop %v561
        %v563 = vmul.f32 %v562, %v557
        %564 = vst [vmem:[%s317] sm:$0xff] %v563
        %s565 = scalar_lea.vmem %s281, 32 [#allocation4]
        %v566 = vld [vmem:[%s565] sm:$0xff]
        %v567 = vld [vmem:[%s565 + $0x8] sm:$0xff]
        %v568 = vld [vmem:[%s565 + $0x10] sm:$0xff]
        %v569 = vld [vmem:[%s565 + $0x18] sm:$0xff]
        %570 = vmatprep.subr.mxu0 %v391
        %571 = vmatpush1.msra.mxu0 %v390
        %572 = vmatprep.subr.mxu0 %v387
        %573 = vmatpush1.msra.mxu0 %v386
        %574 = vmatprep.subr.mxu0 %v383
        %575 = vmatpush1.msra.mxu0 %v382
        %576 = vmatprep.subr.mxu0 %v379
        %577 = vmatpush1.msra.mxu0 %v378
        %578 = vmatprep.subr.mxu0 %v375
        %579 = vmatpush1.msra.mxu0 %v374
        %580 = vmatprep.subr.mxu0 %v371
        %581 = vmatpush1.msra.mxu0 %v370
        %582 = vmatprep.subr.mxu0 %v367
        %583 = vmatpush1.msra.mxu0 %v366
        %584 = vmatprep.subr.mxu0 %v363
        %585 = vmatpush1.msra.mxu0 %v362
        %586 = vmatprep.subr.mxu0 %v359
        %587 = vmatpush1.msra.mxu0 %v358
        %588 = vmatprep.subr.mxu0 %v355
        %589 = vmatpush1.msra.mxu0 %v354
        %590 = vmatprep.subr.mxu0 %v351
        %591 = vmatpush1.msra.mxu0 %v350
        %592 = vmatprep.subr.mxu0 %v347
        %593 = vmatpush1.msra.mxu0 %v346
        %594 = vmatprep.subr.mxu0 %v343
        %595 = vmatpush1.msra.mxu0 %v342
        %596 = vmatprep.subr.mxu0 %v339
        %597 = vmatpush1.msra.mxu0 %v338
        %598 = vmatprep.subr.mxu0 %v335
        %599 = vmatpush1.msra.mxu0 %v334
        %600 = vmatprep.subr.mxu0 %v331
        %601 = vmatpush1.msra.mxu0 %v330
        %602 = vmatprep.subr.mxu0 0.0
        %603 = vmatpush2.msra.mxu0 0.0
        %604 = vmatprep.subr.mxu0 0.0
        %605 = vmatpush2.msra.mxu0 0.0
        %606 = vmatprep.subr.mxu0 0.0
        %607 = vmatpush2.msra.mxu0 0.0
        %608 = vmatprep.subr.mxu0 0.0
        %609 = vmatpush2.msra.mxu0 0.0
        %610 = vmatprep.subr.mxu0 0.0
        %611 = vmatpush2.msra.mxu0 0.0
        %612 = vmatprep.subr.mxu0 0.0
        %613 = vmatpush2.msra.mxu0 0.0
        %614 = vmatprep.subr.mxu0 0.0
        %615 = vmatpush2.msra.mxu0 0.0
        %616 = vmatprep.subr.mxu0 0.0
        %617 = vmatpush2.msra.mxu0 0.0
        %618 = vmatprep.subr.mxu0 0.0
        %619 = vmatpush2.msra.mxu0 0.0
        %620 = vmatprep.subr.mxu0 0.0
        %621 = vmatpush2.msra.mxu0 0.0
        %622 = vmatprep.subr.mxu0 0.0
        %623 = vmatpush2.msra.mxu0 0.0
        %624 = vmatprep.subr.mxu0 0.0
        %625 = vmatpush2.msra.mxu0 0.0
        %626 = vmatprep.subr.mxu0 0.0
        %627 = vmatpush2.msra.mxu0 0.0
        %628 = vmatprep.subr.mxu0 0.0
        %629 = vmatpush2.msra.mxu0 0.0
        %630 = vmatprep.subr.mxu0 0.0
        %631 = vmatpush2.msra.mxu0 0.0
        %632 = vmatprep.subr.mxu0 0.0
        %633 = vmatpush2.msra.mxu0 0.0
        %634 = vmatprep.mubr.f32.mxu0 0.0
        %635 = vmatmul.mubr.f32.gmra.mxu0 %v563
        %v636 = vpop.f32.mrf.mxu0
        %v637 = vadd.f32 0.0, %v636
        %v638 = vpop.f32.mrf.mxu0
        %v639 = vadd.f32 0.0, %v638
        %640 = vdwg.mxu0
        %641 = vmatprep.subr.mxu0 %v393
        %642 = vmatpush1.msra.mxu0 %v392
        %643 = vmatprep.subr.mxu0 %v389
        %644 = vmatpush1.msra.mxu0 %v388
        %645 = vmatprep.subr.mxu0 %v385
        %646 = vmatpush1.msra.mxu0 %v384
        %647 = vmatprep.subr.mxu0 %v381
        %648 = vmatpush1.msra.mxu0 %v380
        %649 = vmatprep.subr.mxu0 %v377
        %650 = vmatpush1.msra.mxu0 %v376
        %651 = vmatprep.subr.mxu0 %v373
        %652 = vmatpush1.msra.mxu0 %v372
        %653 = vmatprep.subr.mxu0 %v369
        %654 = vmatpush1.msra.mxu0 %v368
        %655 = vmatprep.subr.mxu0 %v365
        %656 = vmatpush1.msra.mxu0 %v364
        %657 = vmatprep.subr.mxu0 %v361
        %658 = vmatpush1.msra.mxu0 %v360
        %659 = vmatprep.subr.mxu0 %v357
        %660 = vmatpush1.msra.mxu0 %v356
        %661 = vmatprep.subr.mxu0 %v353
        %662 = vmatpush1.msra.mxu0 %v352
        %663 = vmatprep.subr.mxu0 %v349
        %664 = vmatpush1.msra.mxu0 %v348
        %665 = vmatprep.subr.mxu0 %v345
        %666 = vmatpush1.msra.mxu0 %v344
        %667 = vmatprep.subr.mxu0 %v341
        %668 = vmatpush1.msra.mxu0 %v340
        %669 = vmatprep.subr.mxu0 %v337
        %670 = vmatpush1.msra.mxu0 %v336
        %671 = vmatprep.subr.mxu0 %v333
        %672 = vmatpush1.msra.mxu0 %v332
        %673 = vmatprep.subr.mxu0 0.0
        %674 = vmatpush2.msra.mxu0 0.0
        %675 = vmatprep.subr.mxu0 0.0
        %676 = vmatpush2.msra.mxu0 0.0
        %677 = vmatprep.subr.mxu0 0.0
        %678 = vmatpush2.msra.mxu0 0.0
        %679 = vmatprep.subr.mxu0 0.0
        %680 = vmatpush2.msra.mxu0 0.0
        %681 = vmatprep.subr.mxu0 0.0
        %682 = vmatpush2.msra.mxu0 0.0
        %683 = vmatprep.subr.mxu0 0.0
        %684 = vmatpush2.msra.mxu0 0.0
        %685 = vmatprep.subr.mxu0 0.0
        %686 = vmatpush2.msra.mxu0 0.0
        %687 = vmatprep.subr.mxu0 0.0
        %688 = vmatpush2.msra.mxu0 0.0
        %689 = vmatprep.subr.mxu0 0.0
        %690 = vmatpush2.msra.mxu0 0.0
        %691 = vmatprep.subr.mxu0 0.0
        %692 = vmatpush2.msra.mxu0 0.0
        %693 = vmatprep.subr.mxu0 0.0
        %694 = vmatpush2.msra.mxu0 0.0
        %695 = vmatprep.subr.mxu0 0.0
        %696 = vmatpush2.msra.mxu0 0.0
        %697 = vmatprep.subr.mxu0 0.0
        %698 = vmatpush2.msra.mxu0 0.0
        %699 = vmatprep.subr.mxu0 0.0
        %700 = vmatpush2.msra.mxu0 0.0
        %701 = vmatprep.subr.mxu0 0.0
        %702 = vmatpush2.msra.mxu0 0.0
        %703 = vmatprep.subr.mxu0 0.0
        %704 = vmatpush2.msra.mxu0 0.0
        %705 = vmatprep.mubr.f32.mxu0 0.0
        %706 = vmatmul.mubr.f32.gmra.mxu0 %v563
        %v707 = vpop.f32.mrf.mxu0
        %v708 = vadd.f32 0.0, %v707
        %v709 = vpop.f32.mrf.mxu0
        %v710 = vadd.f32 0.0, %v709
        %711 = vdwg.mxu0
        %v712 = vadd.f32 %v566, %v637
        %v713 = vadd.f32 %v567, %v639
        %v714 = vadd.f32 %v568, %v708
        %v715 = vadd.f32 %v569, %v710
        %v716 = vmul.f32 %v712, 0.5
        %v717 = vmul.f32 %v713, 0.5
        %v718 = vmul.f32 %v714, 0.5
        %v719 = vtanh.pop %v716
        %v720 = vtanh.pop %v717
        %v721 = vtanh.pop %v718
        %v722 = vmul.f32 %v719, 0.5
        %v723 = vmul.f32 %v720, 0.5
        %v724 = vmul.f32 %v721, 0.5
        %v725 = vadd.f32 %v722, 0.5
        %v726 = vadd.f32 %v723, 0.5
        %v727 = vadd.f32 %v724, 0.5
        %v728 = vtanh.pop %v715
        %v729 = vmul.f32 %v561, %v725
        %v730 = vmul.f32 %v726, %v728
        %v731 = vadd.f32 %v729, %v730
        %v732 = vtanh.pop %v731
        %v733 = vmul.f32 %v732, %v727
        %s734 = scalar_lea.vmem %s317, 8 [#allocation12]
        %735 = vst [vmem:[%s734] sm:$0xff] %v733
        %s736 = scalar_lea.vmem %s281, 64 [#allocation4]
        %v737 = vld [vmem:[%s736] sm:$0xff]
        %v738 = vld [vmem:[%s736 + $0x8] sm:$0xff]
        %v739 = vld [vmem:[%s736 + $0x10] sm:$0xff]
        %v740 = vld [vmem:[%s736 + $0x18] sm:$0xff]
        %741 = vmatprep.subr.mxu0 %v391
        %742 = vmatpush1.msra.mxu0 %v390
        %743 = vmatprep.subr.mxu0 %v387
        %744 = vmatpush1.msra.mxu0 %v386
        %745 = vmatprep.subr.mxu0 %v383
        %746 = vmatpush1.msra.mxu0 %v382
        %747 = vmatprep.subr.mxu0 %v379
        %748 = vmatpush1.msra.mxu0 %v378
        %749 = vmatprep.subr.mxu0 %v375
        %750 = vmatpush1.msra.mxu0 %v374
        %751 = vmatprep.subr.mxu0 %v371
        %752 = vmatpush1.msra.mxu0 %v370
        %753 = vmatprep.subr.mxu0 %v367
        %754 = vmatpush1.msra.mxu0 %v366
        %755 = vmatprep.subr.mxu0 %v363
        %756 = vmatpush1.msra.mxu0 %v362
        %757 = vmatprep.subr.mxu0 %v359
        %758 = vmatpush1.msra.mxu0 %v358
        %759 = vmatprep.subr.mxu0 %v355
        %760 = vmatpush1.msra.mxu0 %v354
        %761 = vmatprep.subr.mxu0 %v351
        %762 = vmatpush1.msra.mxu0 %v350
        %763 = vmatprep.subr.mxu0 %v347
        %764 = vmatpush1.msra.mxu0 %v346
        %765 = vmatprep.subr.mxu0 %v343
        %766 = vmatpush1.msra.mxu0 %v342
        %767 = vmatprep.subr.mxu0 %v339
        %768 = vmatpush1.msra.mxu0 %v338
        %769 = vmatprep.subr.mxu0 %v335
        %770 = vmatpush1.msra.mxu0 %v334
        %771 = vmatprep.subr.mxu0 %v331
        %772 = vmatpush1.msra.mxu0 %v330
        %773 = vmatprep.subr.mxu0 0.0
        %774 = vmatpush2.msra.mxu0 0.0
        %775 = vmatprep.subr.mxu0 0.0
        %776 = vmatpush2.msra.mxu0 0.0
        %777 = vmatprep.subr.mxu0 0.0
        %778 = vmatpush2.msra.mxu0 0.0
        %779 = vmatprep.subr.mxu0 0.0
        %780 = vmatpush2.msra.mxu0 0.0
        %781 = vmatprep.subr.mxu0 0.0
        %782 = vmatpush2.msra.mxu0 0.0
        %783 = vmatprep.subr.mxu0 0.0
        %784 = vmatpush2.msra.mxu0 0.0
        %785 = vmatprep.subr.mxu0 0.0
        %786 = vmatpush2.msra.mxu0 0.0
        %787 = vmatprep.subr.mxu0 0.0
        %788 = vmatpush2.msra.mxu0 0.0
        %789 = vmatprep.subr.mxu0 0.0
        %790 = vmatpush2.msra.mxu0 0.0
        %791 = vmatprep.subr.mxu0 0.0
        %792 = vmatpush2.msra.mxu0 0.0
        %793 = vmatprep.subr.mxu0 0.0
        %794 = vmatpush2.msra.mxu0 0.0
        %795 = vmatprep.subr.mxu0 0.0
        %796 = vmatpush2.msra.mxu0 0.0
        %797 = vmatprep.subr.mxu0 0.0
        %798 = vmatpush2.msra.mxu0 0.0
        %799 = vmatprep.subr.mxu0 0.0
        %800 = vmatpush2.msra.mxu0 0.0
        %801 = vmatprep.subr.mxu0 0.0
        %802 = vmatpush2.msra.mxu0 0.0
        %803 = vmatprep.subr.mxu0 0.0
        %804 = vmatpush2.msra.mxu0 0.0
        %805 = vmatprep.mubr.f32.mxu0 0.0
        %806 = vmatmul.mubr.f32.gmra.mxu0 %v733
        %v807 = vpop.f32.mrf.mxu0
        %v808 = vadd.f32 0.0, %v807
        %v809 = vpop.f32.mrf.mxu0
        %v810 = vadd.f32 0.0, %v809
        %811 = vdwg.mxu0
        %812 = vmatprep.subr.mxu0 %v393
        %813 = vmatpush1.msra.mxu0 %v392
        %814 = vmatprep.subr.mxu0 %v389
        %815 = vmatpush1.msra.mxu0 %v388
        %816 = vmatprep.subr.mxu0 %v385
        %817 = vmatpush1.msra.mxu0 %v384
        %818 = vmatprep.subr.mxu0 %v381
        %819 = vmatpush1.msra.mxu0 %v380
        %820 = vmatprep.subr.mxu0 %v377
        %821 = vmatpush1.msra.mxu0 %v376
        %822 = vmatprep.subr.mxu0 %v373
        %823 = vmatpush1.msra.mxu0 %v372
        %824 = vmatprep.subr.mxu0 %v369
        %825 = vmatpush1.msra.mxu0 %v368
        %826 = vmatprep.subr.mxu0 %v365
        %827 = vmatpush1.msra.mxu0 %v364
        %828 = vmatprep.subr.mxu0 %v361
        %829 = vmatpush1.msra.mxu0 %v360
        %830 = vmatprep.subr.mxu0 %v357
        %831 = vmatpush1.msra.mxu0 %v356
        %832 = vmatprep.subr.mxu0 %v353
        %833 = vmatpush1.msra.mxu0 %v352
        %834 = vmatprep.subr.mxu0 %v349
        %835 = vmatpush1.msra.mxu0 %v348
        %836 = vmatprep.subr.mxu0 %v345
        %837 = vmatpush1.msra.mxu0 %v344
        %838 = vmatprep.subr.mxu0 %v341
        %839 = vmatpush1.msra.mxu0 %v340
        %840 = vmatprep.subr.mxu0 %v337
        %841 = vmatpush1.msra.mxu0 %v336
        %842 = vmatprep.subr.mxu0 %v333
        %843 = vmatpush1.msra.mxu0 %v332
        %844 = vmatprep.subr.mxu0 0.0
        %845 = vmatpush2.msra.mxu0 0.0
        %846 = vmatprep.subr.mxu0 0.0
        %847 = vmatpush2.msra.mxu0 0.0
        %848 = vmatprep.subr.mxu0 0.0
        %849 = vmatpush2.msra.mxu0 0.0
        %850 = vmatprep.subr.mxu0 0.0
        %851 = vmatpush2.msra.mxu0 0.0
        %852 = vmatprep.subr.mxu0 0.0
        %853 = vmatpush2.msra.mxu0 0.0
        %854 = vmatprep.subr.mxu0 0.0
        %855 = vmatpush2.msra.mxu0 0.0
        %856 = vmatprep.subr.mxu0 0.0
        %857 = vmatpush2.msra.mxu0 0.0
        %858 = vmatprep.subr.mxu0 0.0
        %859 = vmatpush2.msra.mxu0 0.0
        %860 = vmatprep.subr.mxu0 0.0
        %861 = vmatpush2.msra.mxu0 0.0
        %862 = vmatprep.subr.mxu0 0.0
        %863 = vmatpush2.msra.mxu0 0.0
        %864 = vmatprep.subr.mxu0 0.0
        %865 = vmatpush2.msra.mxu0 0.0
        %866 = vmatprep.subr.mxu0 0.0
        %867 = vmatpush2.msra.mxu0 0.0
        %868 = vmatprep.subr.mxu0 0.0
        %869 = vmatpush2.msra.mxu0 0.0
        %870 = vmatprep.subr.mxu0 0.0
        %871 = vmatpush2.msra.mxu0 0.0
        %872 = vmatprep.subr.mxu0 0.0
        %873 = vmatpush2.msra.mxu0 0.0
        %874 = vmatprep.subr.mxu0 0.0
        %875 = vmatpush2.msra.mxu0 0.0
        %876 = vmatprep.mubr.f32.mxu0 0.0
        %877 = vmatmul.mubr.f32.gmra.mxu0 %v733
        %v878 = vpop.f32.mrf.mxu0
        %v879 = vadd.f32 0.0, %v878
        %v880 = vpop.f32.mrf.mxu0
        %v881 = vadd.f32 0.0, %v880
        %882 = vdwg.mxu0
        %v883 = vadd.f32 %v737, %v808
        %v884 = vadd.f32 %v738, %v810
        %v885 = vadd.f32 %v739, %v879
        %v886 = vadd.f32 %v740, %v881
        %v887 = vmul.f32 %v883, 0.5
        %v888 = vmul.f32 %v884, 0.5
        %v889 = vmul.f32 %v885, 0.5
        %v890 = vtanh.pop %v887
        %v891 = vtanh.pop %v888
        %v892 = vtanh.pop %v889
        %v893 = vmul.f32 %v890, 0.5
        %v894 = vmul.f32 %v891, 0.5
        %v895 = vmul.f32 %v892, 0.5
        %v896 = vadd.f32 %v893, 0.5
        %v897 = vadd.f32 %v894, 0.5
        %v898 = vadd.f32 %v895, 0.5
        %v899 = vtanh.pop %v886
        %v900 = vmul.f32 %v731, %v896
        %v901 = vmul.f32 %v897, %v899
        %v902 = vadd.f32 %v900, %v901
        %v903 = vtanh.pop %v902
        %v904 = vmul.f32 %v903, %v898
        %s905 = scalar_lea.vmem %s317, 16 [#allocation12]
        %906 = vst [vmem:[%s905] sm:$0xff] %v904
        %s907 = scalar_lea.vmem %s281, 96 [#allocation4]
        %v908 = vld [vmem:[%s907] sm:$0xff]
        %v909 = vld [vmem:[%s907 + $0x8] sm:$0xff]
        %v910 = vld [vmem:[%s907 + $0x10] sm:$0xff]
        %v911 = vld [vmem:[%s907 + $0x18] sm:$0xff]
        %912 = vmatprep.subr.mxu0 %v391
        %913 = vmatpush1.msra.mxu0 %v390
        %914 = vmatprep.subr.mxu0 %v387
        %915 = vmatpush1.msra.mxu0 %v386
        %916 = vmatprep.subr.mxu0 %v383
        %917 = vmatpush1.msra.mxu0 %v382
        %918 = vmatprep.subr.mxu0 %v379
        %919 = vmatpush1.msra.mxu0 %v378
        %920 = vmatprep.subr.mxu0 %v375
        %921 = vmatpush1.msra.mxu0 %v374
        %922 = vmatprep.subr.mxu0 %v371
        %923 = vmatpush1.msra.mxu0 %v370
        %924 = vmatprep.subr.mxu0 %v367
        %925 = vmatpush1.msra.mxu0 %v366
        %926 = vmatprep.subr.mxu0 %v363
        %927 = vmatpush1.msra.mxu0 %v362
        %928 = vmatprep.subr.mxu0 %v359
        %929 = vmatpush1.msra.mxu0 %v358
        %930 = vmatprep.subr.mxu0 %v355
        %931 = vmatpush1.msra.mxu0 %v354
        %932 = vmatprep.subr.mxu0 %v351
        %933 = vmatpush1.msra.mxu0 %v350
        %934 = vmatprep.subr.mxu0 %v347
        %935 = vmatpush1.msra.mxu0 %v346
        %936 = vmatprep.subr.mxu0 %v343
        %937 = vmatpush1.msra.mxu0 %v342
        %938 = vmatprep.subr.mxu0 %v339
        %939 = vmatpush1.msra.mxu0 %v338
        %940 = vmatprep.subr.mxu0 %v335
        %941 = vmatpush1.msra.mxu0 %v334
        %942 = vmatprep.subr.mxu0 %v331
        %943 = vmatpush1.msra.mxu0 %v330
        %944 = vmatprep.subr.mxu0 0.0
        %945 = vmatpush2.msra.mxu0 0.0
        %946 = vmatprep.subr.mxu0 0.0
        %947 = vmatpush2.msra.mxu0 0.0
        %948 = vmatprep.subr.mxu0 0.0
        %949 = vmatpush2.msra.mxu0 0.0
        %950 = vmatprep.subr.mxu0 0.0
        %951 = vmatpush2.msra.mxu0 0.0
        %952 = vmatprep.subr.mxu0 0.0
        %953 = vmatpush2.msra.mxu0 0.0
        %954 = vmatprep.subr.mxu0 0.0
        %955 = vmatpush2.msra.mxu0 0.0
        %956 = vmatprep.subr.mxu0 0.0
        %957 = vmatpush2.msra.mxu0 0.0
        %958 = vmatprep.subr.mxu0 0.0
        %959 = vmatpush2.msra.mxu0 0.0
        %960 = vmatprep.subr.mxu0 0.0
        %961 = vmatpush2.msra.mxu0 0.0
        %962 = vmatprep.subr.mxu0 0.0
        %963 = vmatpush2.msra.mxu0 0.0
        %964 = vmatprep.subr.mxu0 0.0
        %965 = vmatpush2.msra.mxu0 0.0
        %966 = vmatprep.subr.mxu0 0.0
        %967 = vmatpush2.msra.mxu0 0.0
        %968 = vmatprep.subr.mxu0 0.0
        %969 = vmatpush2.msra.mxu0 0.0
        %970 = vmatprep.subr.mxu0 0.0
        %971 = vmatpush2.msra.mxu0 0.0
        %972 = vmatprep.subr.mxu0 0.0
        %973 = vmatpush2.msra.mxu0 0.0
        %974 = vmatprep.subr.mxu0 0.0
        %975 = vmatpush2.msra.mxu0 0.0
        %976 = vmatprep.mubr.f32.mxu0 0.0
        %977 = vmatmul.mubr.f32.gmra.mxu0 %v904
        %v978 = vpop.f32.mrf.mxu0
        %v979 = vadd.f32 0.0, %v978
        %v980 = vpop.f32.mrf.mxu0
        %v981 = vadd.f32 0.0, %v980
        %982 = vdwg.mxu0
        %983 = vmatprep.subr.mxu0 %v393
        %984 = vmatpush1.msra.mxu0 %v392
        %985 = vmatprep.subr.mxu0 %v389
        %986 = vmatpush1.msra.mxu0 %v388
        %987 = vmatprep.subr.mxu0 %v385
        %988 = vmatpush1.msra.mxu0 %v384
        %989 = vmatprep.subr.mxu0 %v381
        %990 = vmatpush1.msra.mxu0 %v380
        %991 = vmatprep.subr.mxu0 %v377
        %992 = vmatpush1.msra.mxu0 %v376
        %993 = vmatprep.subr.mxu0 %v373
        %994 = vmatpush1.msra.mxu0 %v372
        %995 = vmatprep.subr.mxu0 %v369
        %996 = vmatpush1.msra.mxu0 %v368
        %997 = vmatprep.subr.mxu0 %v365
        %998 = vmatpush1.msra.mxu0 %v364
        %999 = vmatprep.subr.mxu0 %v361
        %1000 = vmatpush1.msra.mxu0 %v360
        %1001 = vmatprep.subr.mxu0 %v357
        %1002 = vmatpush1.msra.mxu0 %v356
        %1003 = vmatprep.subr.mxu0 %v353
        %1004 = vmatpush1.msra.mxu0 %v352
        %1005 = vmatprep.subr.mxu0 %v349
        %1006 = vmatpush1.msra.mxu0 %v348
        %1007 = vmatprep.subr.mxu0 %v345
        %1008 = vmatpush1.msra.mxu0 %v344
        %1009 = vmatprep.subr.mxu0 %v341
        %1010 = vmatpush1.msra.mxu0 %v340
        %1011 = vmatprep.subr.mxu0 %v337
        %1012 = vmatpush1.msra.mxu0 %v336
        %1013 = vmatprep.subr.mxu0 %v333
        %1014 = vmatpush1.msra.mxu0 %v332
        %1015 = vmatprep.subr.mxu0 0.0
        %1016 = vmatpush2.msra.mxu0 0.0
        %1017 = vmatprep.subr.mxu0 0.0
        %1018 = vmatpush2.msra.mxu0 0.0
        %1019 = vmatprep.subr.mxu0 0.0
        %1020 = vmatpush2.msra.mxu0 0.0
        %1021 = vmatprep.subr.mxu0 0.0
        %1022 = vmatpush2.msra.mxu0 0.0
        %1023 = vmatprep.subr.mxu0 0.0
        %1024 = vmatpush2.msra.mxu0 0.0
        %1025 = vmatprep.subr.mxu0 0.0
        %1026 = vmatpush2.msra.mxu0 0.0
        %1027 = vmatprep.subr.mxu0 0.0
        %1028 = vmatpush2.msra.mxu0 0.0
        %1029 = vmatprep.subr.mxu0 0.0
        %1030 = vmatpush2.msra.mxu0 0.0
        %1031 = vmatprep.subr.mxu0 0.0
        %1032 = vmatpush2.msra.mxu0 0.0
        %1033 = vmatprep.subr.mxu0 0.0
        %1034 = vmatpush2.msra.mxu0 0.0
        %1035 = vmatprep.subr.mxu0 0.0
        %1036 = vmatpush2.msra.mxu0 0.0
        %1037 = vmatprep.subr.mxu0 0.0
        %1038 = vmatpush2.msra.mxu0 0.0
        %1039 = vmatprep.subr.mxu0 0.0
        %1040 = vmatpush2.msra.mxu0 0.0
        %1041 = vmatprep.subr.mxu0 0.0
        %1042 = vmatpush2.msra.mxu0 0.0
        %1043 = vmatprep.subr.mxu0 0.0
        %1044 = vmatpush2.msra.mxu0 0.0
        %1045 = vmatprep.subr.mxu0 0.0
        %1046 = vmatpush2.msra.mxu0 0.0
        %1047 = vmatprep.mubr.f32.mxu0 0.0
        %1048 = vmatmul.mubr.f32.gmra.mxu0 %v904
        %v1049 = vpop.f32.mrf.mxu0
        %v1050 = vadd.f32 0.0, %v1049
        %v1051 = vpop.f32.mrf.mxu0
        %v1052 = vadd.f32 0.0, %v1051
        %1053 = vdwg.mxu0
        %v1054 = vadd.f32 %v908, %v979
        %v1055 = vadd.f32 %v909, %v981
        %v1056 = vadd.f32 %v910, %v1050
        %v1057 = vadd.f32 %v911, %v1052
        %v1058 = vmul.f32 %v1054, 0.5
        %v1059 = vmul.f32 %v1055, 0.5
        %v1060 = vmul.f32 %v1056, 0.5
        %v1061 = vtanh.pop %v1058
        %v1062 = vtanh.pop %v1059
        %v1063 = vtanh.pop %v1060
        %v1064 = vmul.f32 %v1061, 0.5
        %v1065 = vmul.f32 %v1062, 0.5
        %v1066 = vmul.f32 %v1063, 0.5
        %v1067 = vadd.f32 %v1064, 0.5
        %v1068 = vadd.f32 %v1065, 0.5
        %v1069 = vadd.f32 %v1066, 0.5
        %v1070 = vtanh.pop %v1057
        %v1071 = vmul.f32 %v902, %v1067
        %v1072 = vmul.f32 %v1068, %v1070
        %v1073 = vadd.f32 %v1071, %v1072
        %v1074 = vtanh.pop %v1073
        %v1075 = vmul.f32 %v1074, %v1069
        %s1076 = scalar_lea.vmem %s317, 24 [#allocation12]
        %1077 = vst [vmem:[%s1076] sm:$0xff] %v1075
        %1078 = vst [vmem:[#allocation2] sm:$0xff] %v1075
        %1079 = vst [vmem:[#allocation3] sm:$0xff] %v1073
        %p1080 = scmp.eq.s32.totalorder %s31, 1
        // Predicated region
        $region57: #{tpu_custom_call.1} parent=35 // pred_check
          %p1081 = pneg %p1080
        $region58: #{tpu_custom_call.1} parent=35 // pred_check_branch
          %1083 = sbr.rel (%p1081) target = $region60
        $region59: #{tpu_custom_call.1} parent=35 // pred_region
          %1084 = vst [vmem:[#allocation13] sm:$0xff] %v1073
        $region60: #{tpu_custom_call.1} parent=35 // pred_fallthru
          _
        %s1085 = sand.u32 %s149, 1
        %s1086 = scalar_lea.sflag [#allocation6], %s1085
        %s1087 = sand.u32 %s149, 1
        %s1088 = smul.addr %s1087, 32
        %s1089 = scalar_lea.vmem [#allocation12], %s1088
        // Predicated region
        $region61: #{tpu_custom_call.1} parent=35 // pred_check
          %p1090 = pneg %p159
        $region62: #{tpu_custom_call.1} parent=35 // pred_check_branch
          %1092 = sbr.rel (%p1090) target = $region64
        $region63: #{tpu_custom_call.1} parent=35 // pred_region
          %s1093 = smul.u32 4, %s31
          %s1095 = ssub.s32 512, 512
          %1096 = vsyncadd %s1086, %s1095
          %s1097 = sadd.s32 %s30, %s1093
          %s1098 = smul.addr %s1097, 128
          %s1099 = scalar_lea.hbm %s4, %s1098
          %s1100 = sshll.u32 %s1089, 4
          %s1101 = int_to_ptr.vmem [resolvable:$true] %s1100
          %1106 = dma.vmem_to_hbm [thread:$0]  %s1101, 512, %s1099, %s1086, 128, 128, 8
        $region64: #{tpu_custom_call.1} parent=35 // pred_fallthru
          _
        // Predicated region
        $region65: #{tpu_custom_call.1} parent=35 // pred_check
          %p1107 = pneg %p185
        $region66: #{tpu_custom_call.1} parent=35 // pred_check_branch
          %1109 = sbr.rel (%p1107) target = $region68
        $region67: #{tpu_custom_call.1} parent=35 // pred_region
          %s1111 = ssub.s32 128, 128
          %1112 = vsyncadd [#allocation14], %s1111
          %s1113 = smul.addr %s30, 128
          %s1114 = scalar_lea.hbm %s5, %s1113
          %s1116 = sshll.u32 [#allocation13], 4
          %s1117 = int_to_ptr.vmem [resolvable:$true] %s1116
          %1119 = dma.vmem_to_hbm [thread:$0]  %s1117, 128, %s1114, [#allocation14]
        $region68: #{tpu_custom_call.1} parent=35 // pred_fallthru
          _
        // Predicated region
        $region69: #{tpu_custom_call.1} parent=35 // pred_check
          %p1120 = pneg %p185
        $region70: #{tpu_custom_call.1} parent=35 // pred_check_branch
          %1122 = sbr.rel (%p1120) target = $region72
        $region71: #{tpu_custom_call.1} parent=35 // pred_region
          %1123 = dma.done [#allocation14], 128
        $region72: #{tpu_custom_call.1} parent=35 // pred_fallthru
          _
      $region36: #{tpu_custom_call.1} parent=5 // pred_fallthru
        _
      %p1124 = scmp.le.s32.totalorder 2, %s21
      // Predicated region
      $region73: #{tpu_custom_call.1} parent=5 // pred_check
        %p1125 = pneg %p1124
      $region74: #{tpu_custom_call.1} parent=5 // pred_check_branch
        %1127 = sbr.rel (%p1125) target = $region76
      $region75: #{tpu_custom_call.1} parent=5 // pred_region
        %s1128 = ssub.s32 %s21, 2
        // Predicated region
        $region77: #{tpu_custom_call.1} parent=75 // pred_check
          %p1129 = pneg %p165
        $region78: #{tpu_custom_call.1} parent=75 // pred_check_branch
          %1131 = sbr.rel (%p1129) target = $region80
        $region79: #{tpu_custom_call.1} parent=75 // pred_region
          %s1132 = sand.u32 %s150, 1
          %s1133 = scalar_lea.sflag [#allocation6], %s1132
          %s1134 = sand.u32 %s150, 1
          %s1135 = smul.addr %s1134, 32
          %s1136 = scalar_lea.vmem [#allocation12], %s1135
          %1137 = dma.done %s1133, 512
        $region80: #{tpu_custom_call.1} parent=75 // pred_fallthru
          _
      $region76: #{tpu_custom_call.1} parent=5 // pred_fallthru
        _
    $region6: #{tpu_custom_call.1} parent=1 // loop_footer
      %s25 = sadd.s32 1, %s21
    $region7: #{tpu_custom_call.1} parent=1 // loop_footer_branch
      %20 = sbr.rel target = $region3
    $region8: #{tpu_custom_call.1} parent=1 // loop_exit
      _
    %1138 = vsyncpa [#allocation5], 1
    %s1139 = scalar_lea.sflag [#allocation5], 1
    %1140 = vsyncpa %s1139, 1
    %1141 = vsyncpa [#allocation8], 1
    %1142 = vsyncpa [#allocation11], 1
    %1143 = vsyncpa [#allocation6], 1
    %s1144 = scalar_lea.sflag [#allocation6], 1
    %1145 = vsyncpa %s1144, 1
    %1146 = vsyncpa [#allocation14], 1

</llo_original>
